<compile_context>
chip_gen: v7x
topology: tpu7x:2x2x1
jax: 0.10.0
libtpu: 0.0.40
codegen_flags: <defaults>
</compile_context>

<pallas_src>
import functools

import jax
import jax.numpy as jnp
from jax import lax
from jax.experimental import pallas as pl
from jax.experimental.pallas import tpu as pltpu


# ----------------------------------------------------------------------------
# Kernel 1: power iteration -> u, v, sigma   (scaled weight never hits HBM)
# ----------------------------------------------------------------------------
def spectral_norm_kernel(w_ref, u_ref, v_ref, u_out_ref, v_out_ref,
                         sigma_ref, *, power_iterations: int,
                         eps: float = 1e-12):
    w = w_ref[...].astype(jnp.float32)          # (H, Wd)  H = Cout, Wd = Cin*KH*KW
    u = u_ref[...].astype(jnp.float32)          # (H, 1)   column vector
    v = v_ref[...].astype(jnp.float32)          # (1, Wd)  row vector

    wv = u                                      # wrapper enforces power_iterations >= 1
    for _ in range(power_iterations):
        # v = l2normalize(W^T u): contract the H axis; w stays in its stored
        # (MXU-native) orientation, only the (H,1) vector gets relayouted.
        v = lax.dot_general(u, w, (((0,), (0,)), ((), ())),
                            preferred_element_type=jnp.float32)      # (1, Wd)
        v = v * (1.0 / (jnp.sqrt(jnp.sum(v * v)) + eps))
        # u = l2normalize(W v): contract the Wd axis, again with w MXU-native.
        wv = lax.dot_general(w, v, (((1,), (1,)), ((), ())),
                             preferred_element_type=jnp.float32)     # (H, 1)
        u = wv * (1.0 / (jnp.sqrt(jnp.sum(wv * wv)) + eps))

    sigma_ref[...] = jnp.sum(u * wv, keepdims=True)   # (1,1), u . (W v)
    u_out_ref[...] = u.astype(u_out_ref.dtype)
    v_out_ref[...] = v.astype(v_out_ref.dtype)


# ----------------------------------------------------------------------------
# Kernel 2: 3x3 / stride-1 / pad-1 conv.
#   - halo window (+ im2col for Cin < 128) built ONCE per (batch, row-tile),
#     i.e. only on the first Cout tile (c == 0); Cout axis is sequential.
#   - Cin < 128 : single matmul with K = 9*Cin from the cached im2col slab.
#   - Cin >= 128: 9 per-tap matmuls (K = Cin) accumulated in f32, no im2col.
# ----------------------------------------------------------------------------
def conv3x3_kernel(x_ref, xprev_ref, xnext_ref, w_ref, b_ref, o_ref, *scratch,
                   TH, W, Cin, KH, KW, use_im2col):
    if use_im2col:
        xw_ref, col_ref = scratch
    else:
        (xw_ref,) = scratch

    r = pl.program_id(1)
    c = pl.program_id(2)
    nrows = pl.num_programs(1)

    # The padded window / im2col depend only on (n, r): rebuild them only on
    # the first Cout tile. Valid because the c axis is innermost and marked
    # "arbitrary" (sequential per core) and VMEM scratch persists across steps.
    @pl.when(c == 0)
    def _build():
        # Border-only zeroing: interior is fully overwritten by x, halo rows
        # by the neighbour fetch (or zeros when there is no neighbour).
        zero_col = jnp.zeros((TH + 2, 1, Cin), dtype=xw_ref.dtype)
        xw_ref[:, 0:1, :] = zero_col                     # left border column
        xw_ref[:, W + 1:W + 2, :] = zero_col             # right border column
        xw_ref[1:TH + 1, 1:W + 1, :] = x_ref[0]          # interior rows

        top = jnp.where(r > 0, xprev_ref[0], jnp.zeros_like(xprev_ref[0]))
        bot = jnp.where(r < nrows - 1, xnext_ref[0],
                        jnp.zeros_like(xnext_ref[0]))
        xw_ref[0:1, 1:W + 1, :] = top                    # top halo / zeros
        xw_ref[TH + 1:TH + 2, 1:W + 1, :] = bot          # bottom halo / zeros

        if use_im2col:
            # TODO(synk): tap writes are Cin-wide masked stores when
            # Cin % 128 != 0; a K-major / lane-dense col layout (or folding
            # W*Cin onto lanes with pltpu.roll) would lift store efficiency.
            xw = xw_ref[...]
            for kh in range(KH):
                for kw in range(KW):
                    j = (kh * KW + kw) * Cin
                    col_ref[:, j:j + Cin] = (
                        xw[kh:kh + TH, kw:kw + W, :].reshape(TH * W, Cin))

    if use_im2col:
        acc = jnp.dot(col_ref[...], w_ref[...],
                      preferred_element_type=jnp.float32)        # (TH*W, TCout)
    else:
        xw = xw_ref[...]
        acc = None
        for kh in range(KH):
            for kw in range(KW):
                j = (kh * KW + kw) * Cin
                lhs = xw[kh:kh + TH, kw:kw + W, :].reshape(TH * W, Cin)
                part = jnp.dot(lhs, w_ref[j:j + Cin, :],
                               preferred_element_type=jnp.float32)
                acc = part if acc is None else acc + part

    # epilogue: bias only (1/sigma already folded into the weight), bf16 store
    o_ref[0] = (acc + b_ref[...]).astype(o_ref.dtype)


# ----------------------------------------------------------------------------
# helpers
# ----------------------------------------------------------------------------
def _round_up(x, m):
    return (x + m - 1) // m * m


def _device_kind():
    try:
        return jax.devices()[0].device_kind.lower()
    except Exception:
        return ""


def _vmem_capacity_bytes():
    try:
        cap = int(pltpu.get_tpu_info().vmem_capacity_bytes)
        if cap > 0:
            return cap
    except Exception:
        pass
    # conservative fallback: v7x has 64 MiB per TC, v5e/v6e have 128 MiB.
    return (64 if "v7" in _device_kind() else 128) * 1024 * 1024


def _auto_row_tile(H, W, Cin, Kdim, TCout, use_im2col, vmem_budget_bytes,
                   prefer_split=False, m_cap=8192):
    """Largest TH dividing H with TH*W 8-aligned (or TH == H), TH*W <= m_cap,
    and the double-buffered working set within the VMEM budget. If
    prefer_split (e.g. N == 1), prefer RT >= 2 so both v7x cores get work."""
    bs, fs = 2, 4

    def fits(th):
        per_step = (th * W * Cin * bs + 2 * W * Cin * bs
                    + Kdim * TCout * bs + TCout * fs + th * W * TCout * bs)
        scratch = ((th + 2) * (W + 2) * Cin * bs
                   + (th * W * Kdim * bs if use_im2col else th * W * TCout * fs))
        return 2 * per_step + scratch + (2 << 20) <= vmem_budget_bytes

    cands = []
    for th in range(1, H + 1):
        if H % th:
            continue
        if th != H and (th * W) % 8:
            continue
        if th * W > m_cap:
            continue
        if not fits(th):
            continue
        cands.append(th)
    if not cands:
        return H                       # tiny / degenerate inputs: whole image
    if prefer_split:
        split = [t for t in cands if t < H]
        if split:
            return max(split)
    return max(cands)


# ----------------------------------------------------------------------------
# Wrapper: SpectralNorm(Conv2d(Cin, Cout, 3, padding=1)).forward(x)
# ----------------------------------------------------------------------------
def spectral_norm_conv_forward(x_nchw, w_bar_oihw, bias, u, v,
                               power_iterations=1, rows_per_tile=None):
    if power_iterations < 1:
        raise ValueError("power_iterations must be >= 1")

    N, Cin, H, W = x_nchw.shape
    Cout, Cin_w, KH, KW = w_bar_oihw.shape
    assert Cin == Cin_w
    height, width = Cout, Cin * KH * KW

    # -------- kernel 1: u, v, sigma (scaled weight never hits HBM) -----------
    w_mat = w_bar_oihw.reshape(height, width).astype(jnp.float32)
    u_col = u.reshape(height, 1).astype(jnp.float32)
    v_row = v.reshape(1, width).astype(jnp.float32)

    u_new, v_new, sigma = pl.pallas_call(
        functools.partial(spectral_norm_kernel,
                          power_iterations=power_iterations),
        out_shape=(
            jax.ShapeDtypeStruct((height, 1), jnp.float32),
            jax.ShapeDtypeStruct((1, width), jnp.float32),
            jax.ShapeDtypeStruct((1, 1), jnp.float32),
        ),
    )(w_mat, u_col, v_row)

    # -------- kernel 2: conv with 1/sigma folded into the weight -------------
    kind = _device_kind()
    vmem_cap = _vmem_capacity_bytes()

    Cout_pad = _round_up(Cout, 128)             # lane-dense stores / MXU N dim
    if "v5" in kind:
        TCout = 128                             # v5e MXU is 128 wide
    else:
        TCout = 256 if Cout_pad % 256 == 0 else 128
    CT = Cout_pad // TCout

    Kdim = KH * KW * Cin
    use_im2col = Cin < 128                      # big Cin: per-tap accumulation
    conv_dtype = jnp.bfloat16                   # bf16 MXU operands, f32 accum

    if rows_per_tile is None:
        rows_per_tile = _auto_row_tile(
            H, W, Cin, Kdim, TCout, use_im2col,
            vmem_budget_bytes=int(0.6 * vmem_cap),
            prefer_split=(N == 1))
    TH = rows_per_tile
    assert H % TH == 0, "rows_per_tile must divide H"
    assert TH == H or (TH * W) % 8 == 0, "row tile must keep TH*W 8-aligned"
    RT = H // TH

    # NCHW -> NHWC (+ bf16 cast) is one XLA pass; halo is assembled in-kernel.
    x_nhwc = jnp.transpose(x_nchw, (0, 2, 3, 1)).astype(conv_dtype)

    # weight OIHW -> (KH*KW*Cin, Cout_pad) with 1/sigma folded in (fuses into
    # the transpose/pad/cast that is materialized anyway).
    w_k = jnp.transpose(w_bar_oihw, (2, 3, 1, 0)).reshape(Kdim, Cout)
    w_k = w_k.astype(jnp.float32) / sigma[0, 0]
    w_k = jnp.pad(w_k, ((0, 0), (0, Cout_pad - Cout))).astype(conv_dtype)
    b_k = jnp.pad(bias.astype(jnp.float32),
                  (0, Cout_pad - Cout)).reshape(1, Cout_pad)

    # VMEM budget from actual tile sizes (double-buffered) + scratch + headroom,
    # capped well below the queried physical capacity (64 MiB on v7x).
    bs, fs = 2, 4
    per_step = (TH * W * Cin * bs + 2 * W * Cin * bs
                + Kdim * TCout * bs + TCout * fs + TH * W * TCout * bs)
    scratch_bytes = ((TH + 2) * (W + 2) * Cin * bs
                     + (TH * W * Kdim * bs if use_im2col
                        else TH * W * TCout * fs))
    vmem_limit = int(min(int(0.75 * vmem_cap),
                         max(32 << 20,
                             2 * per_step + scratch_bytes + (8 << 20))))

    scratch_shapes = [pltpu.VMEM((TH + 2, W + 2, Cin), conv_dtype)]
    if use_im2col:
        scratch_shapes.append(pltpu.VMEM((TH * W, Kdim), conv_dtype))

    out_flat = pl.pallas_call(
        functools.partial(conv3x3_kernel, TH=TH, W=W, Cin=Cin, KH=KH, KW=KW,
                          use_im2col=use_im2col),
        grid=(N, RT, CT),                       # Cout axis innermost (cached scratch)
        in_specs=[
            pl.BlockSpec((1, TH, W, Cin),
                         lambda n, r, c: (n, r, 0, 0)),              # row tile
            pl.BlockSpec((1, 1, W, Cin),                             # row above
                         lambda n, r, c: (n, jnp.maximum(r * TH - 1, 0), 0, 0)),
            pl.BlockSpec((1, 1, W, Cin),                             # row below
                         lambda n, r, c: (n, jnp.minimum(r * TH + TH, H - 1), 0, 0)),
            pl.BlockSpec((Kdim, TCout), lambda n, r, c: (0, c)),     # weight
            pl.BlockSpec((1, TCout), lambda n, r, c: (0, c)),        # bias
        ],
        out_specs=pl.BlockSpec((1, TH * W, TCout), lambda n, r, c: (n, r, c)),
        out_shape=jax.ShapeDtypeStruct((N, H * W, Cout_pad), conv_dtype),
        scratch_shapes=scratch_shapes,
        compiler_params=pltpu.CompilerParams(
            dimension_semantics=("parallel", "parallel", "arbitrary"),
            vmem_limit_bytes=vmem_limit),
    )(x_nhwc, x_nhwc, x_nhwc, w_k, b_k)

    # back to PyTorch layout; channel un-pad + transpose fuse into one XLA pass
    y = out_flat.reshape(N, H, W, Cout_pad)[..., :Cout]
    y = jnp.transpose(y, (0, 3, 1, 2)).astype(x_nchw.dtype)
    return y, u_new.reshape(height), v_new.reshape(width)


# ----------------------------------------------------------------------------
# Pure-JAX reference (mirrors the PyTorch math) for a correctness check
# ----------------------------------------------------------------------------
def reference_forward(x_nchw, w_bar_oihw, bias, u, v, power_iterations=1,
                      eps=1e-12):
    Cout = w_bar_oihw.shape[0]
    w_mat = w_bar_oihw.reshape(Cout, -1).astype(jnp.float32)
    u = u.astype(jnp.float32)
    v = v.astype(jnp.float32)
    for _ in range(power_iterations):
        v = w_mat.T @ u
        v = v / (jnp.linalg.norm(v) + eps)
        u = w_mat @ v
        u = u / (jnp.linalg.norm(u) + eps)
    sigma = jnp.dot(u, w_mat @ v)
    w_sn = w_bar_oihw / sigma
    y = lax.conv_general_dilated(
        x_nchw, w_sn, window_strides=(1, 1), padding=((1, 1), (1, 1)),
        dimension_numbers=("NCHW", "OIHW", "NCHW"))
    return y + bias.reshape(1, Cout, 1, 1), u, v


def _run_case(key, N, Cin, H, W, Cout, rows_per_tile, atol, rtol,
              power_iterations=1):
    KH = KW = 3
    kx, kw, kb, ku, kv = jax.random.split(key, 5)
    x = jax.random.normal(kx, (N, Cin, H, W), jnp.float32)
    w_bar = jax.random.normal(kw, (Cout, Cin, KH, KW), jnp.float32) * 0.1
    bias = jax.random.normal(kb, (Cout,), jnp.float32) * 0.1
    u0 = jax.random.normal(ku, (Cout,), jnp.float32)
    v0 = jax.random.normal(kv, (Cin * KH * KW,), jnp.float32)
    u0 = u0 / (jnp.linalg.norm(u0) + 1e-12)
    v0 = v0 / (jnp.linalg.norm(v0) + 1e-12)

    fwd = jax.jit(functools.partial(spectral_norm_conv_forward,
                                    power_iterations=power_iterations,
                                    rows_per_tile=rows_per_tile))
    out, u_new, v_new = fwd(x, w_bar, bias, u0, v0)
    out = jax.block_until_ready(out)

    ref_y, ref_u, ref_v = reference_forward(x, w_bar, bias, u0, v0,
                                            power_iterations=power_iterations)
    assert out.shape == (N, Cout, H, W)
    # kernel runs the conv with bf16 MXU operands + bf16 output (f32
    # accumulation), so the comparison against the pure-f32 reference uses a
    # bf16-level tolerance.
    assert jnp.allclose(out, ref_y, atol=atol, rtol=rtol), "conv output mismatch"
    assert jnp.allclose(u_new, ref_u, atol=1e-2, rtol=1e-2), "u mismatch"
    assert jnp.allclose(v_new, ref_v, atol=1e-2, rtol=1e-2), "v mismatch"


if __name__ == "__main__":
    key = jax.random.PRNGKey(0)
    k1, k2 = jax.random.split(key)

    # Small-Cin im2col path; rows_per_tile=8 -> 2 row tiles per image,
    # exercising the in-kernel halo assembly.
    _run_case(k1, N=2, Cin=4, H=16, W=16, Cout=8, rows_per_tile=8,
              atol=3e-2, rtol=3e-2)

    # Large-Cin per-tap path with Cout_pad=384 (3 Cout tiles), exercising the
    # c==0 window caching, the "arbitrary" Cout axis and auto tile selection.
    _run_case(k2, N=1, Cin=128, H=8, W=8, Cout=320, rows_per_tile=None,
              atol=5e-2, rtol=5e-2)

    print("KERNEL_OK")
</pallas_src>

<mosaic_0001>
module attributes {stable_mosaic.version = 11 : i64} {
  func.func @spectral_norm_kernel(%arg0: memref<8x36xf32, #tpu.memory_space<vmem>>, %arg1: memref<8x1xf32, #tpu.memory_space<vmem>>, %arg2: memref<1x36xf32, #tpu.memory_space<vmem>>, %arg3: memref<8x1xf32, #tpu.memory_space<vmem>>, %arg4: memref<1x36xf32, #tpu.memory_space<vmem>>, %arg5: memref<1x1xf32, #tpu.memory_space<vmem>>) attributes {dimension_semantics = [], scalar_prefetch = 0 : i64, scratch_operands = 0 : i64, tpu.core_type = #tpu.core_type<tc>} {
    %c0 = arith.constant 0 : index
    %c0_0 = arith.constant 0 : index
    %0 = vector.load %arg0[%c0, %c0_0] : memref<8x36xf32, #tpu.memory_space<vmem>>, vector<8x36xf32>
    %c0_1 = arith.constant 0 : index
    %c0_2 = arith.constant 0 : index
    %1 = vector.load %arg1[%c0_1, %c0_2] : memref<8x1xf32, #tpu.memory_space<vmem>>, vector<8x1xf32>
    %cst = arith.constant dense<0.000000e+00> : vector<1x36xf32>
    %2 = tpu.matmul %1, %0, %cst {dimension_numbers = #tpu.dot_dimension_numbers<[0], [0], [1], [1], [0, 1, 1, 1], [], []>} : vector<8x1xf32>, vector<8x36xf32>, vector<1x36xf32> -> vector<1x36xf32>
    %3 = arith.mulf %2, %2 : vector<1x36xf32>
    %4 = vector.shape_cast %3 : vector<1x36xf32> to vector<1x1x36xf32>
    %cst_3 = arith.constant dense<0.000000e+00> : vector<1xf32>
    %5 = vector.multi_reduction <add>, %4, %cst_3 [1, 2] : vector<1x1x36xf32> to vector<1xf32>
    %6 = vector.shape_cast %5 : vector<1xf32> to vector<1x1x1xf32>
    %7 = vector.extract %6[0, 0, 0] : f32 from vector<1x1x1xf32>
    %8 = math.sqrt %7 : f32
    %cst_4 = arith.constant 9.99999996E-13 : f32
    %9 = arith.addf %8, %cst_4 : f32
    %cst_5 = arith.constant 1.000000e+00 : f32
    %10 = arith.divf %cst_5, %9 : f32
    %11 = vector.broadcast %10 : f32 to vector<1x36xf32>
    %12 = arith.mulf %2, %11 : vector<1x36xf32>
    %cst_6 = arith.constant dense<0.000000e+00> : vector<8x1xf32>
    %13 = tpu.matmul %0, %12, %cst_6 {dimension_numbers = #tpu.dot_dimension_numbers<[1], [1], [0], [0], [0, 0, 1, 0], [], []>} : vector<8x36xf32>, vector<1x36xf32>, vector<8x1xf32> -> vector<8x1xf32>
    %14 = arith.mulf %13, %13 : vector<8x1xf32>
    %15 = vector.shape_cast %14 : vector<8x1xf32> to vector<1x8x1xf32>
    %cst_7 = arith.constant dense<0.000000e+00> : vector<1xf32>
    %16 = vector.multi_reduction <add>, %15, %cst_7 [1, 2] : vector<1x8x1xf32> to vector<1xf32>
    %17 = vector.shape_cast %16 : vector<1xf32> to vector<1x1x1xf32>
    %18 = vector.extract %17[0, 0, 0] : f32 from vector<1x1x1xf32>
    %19 = math.sqrt %18 : f32
    %cst_8 = arith.constant 9.99999996E-13 : f32
    %20 = arith.addf %19, %cst_8 : f32
    %cst_9 = arith.constant 1.000000e+00 : f32
    %21 = arith.divf %cst_9, %20 : f32
    %22 = vector.broadcast %21 : f32 to vector<8x1xf32>
    %23 = arith.mulf %13, %22 : vector<8x1xf32>
    %24 = arith.mulf %23, %13 : vector<8x1xf32>
    %25 = vector.shape_cast %24 : vector<8x1xf32> to vector<1x8x1xf32>
    %cst_10 = arith.constant dense<0.000000e+00> : vector<1xf32>
    %26 = vector.multi_reduction <add>, %25, %cst_10 [1, 2] : vector<1x8x1xf32> to vector<1xf32>
    %27 = vector.shape_cast %26 : vector<1xf32> to vector<1x1x1xf32>
    %28 = vector.extract %27[0, 0, 0] : f32 from vector<1x1x1xf32>
    %29 = vector.broadcast %28 : f32 to vector<1x1xf32>
    %c0_11 = arith.constant 0 : index
    %c0_12 = arith.constant 0 : index
    %30 = vector.load %arg5[%c0_11, %c0_12] : memref<1x1xf32, #tpu.memory_space<vmem>>, vector<1x1xf32>
    tpu.vector_store %arg5[%c0_11, %c0_12], %29 {strides = array<i32>} : memref<1x1xf32, #tpu.memory_space<vmem>>, vector<1x1xf32>,
    %c0_13 = arith.constant 0 : index
    %c0_14 = arith.constant 0 : index
    %31 = vector.load %arg3[%c0_13, %c0_14] : memref<8x1xf32, #tpu.memory_space<vmem>>, vector<8x1xf32>
    tpu.vector_store %arg3[%c0_13, %c0_14], %23 {strides = array<i32>} : memref<8x1xf32, #tpu.memory_space<vmem>>, vector<8x1xf32>,
    %c0_15 = arith.constant 0 : index
    %c0_16 = arith.constant 0 : index
    %32 = vector.load %arg4[%c0_15, %c0_16] : memref<1x36xf32, #tpu.memory_space<vmem>>, vector<1x36xf32>
    tpu.vector_store %arg4[%c0_15, %c0_16], %12 {strides = array<i32>} : memref<1x36xf32, #tpu.memory_space<vmem>>, vector<1x36xf32>,
    return
  }
}

module attributes {stable_mosaic.version = 11 : i64} {
  func.func @conv3x3_kernel(%arg0: i32, %arg1: i32, %arg2: i32, %arg3: memref<1x8x16x4xbf16, #tpu.memory_space<vmem>>, %arg4: memref<1x1x16x4xbf16, #tpu.memory_space<vmem>>, %arg5: memref<1x1x16x4xbf16, #tpu.memory_space<vmem>>, %arg6: memref<36x128xbf16, #tpu.memory_space<vmem>>, %arg7: memref<1x128xf32, #tpu.memory_space<vmem>>, %arg8: memref<1x128x128xbf16, #tpu.memory_space<vmem>>, %arg9: memref<10x18x4xbf16, #tpu.memory_space<vmem>>, %arg10: memref<128x36xbf16, #tpu.memory_space<vmem>>) attributes {dimension_semantics = [#tpu.dimension_semantics<parallel>, #tpu.dimension_semantics<parallel>, #tpu.dimension_semantics<arbitrary>], iteration_bounds = array<i64: 2, 2, 1>, scalar_prefetch = 0 : i64, scratch_operands = 2 : i64, tpu.core_type = #tpu.core_type<tc>, window_params = [{transform_indices = @transform_0, window_bounds = array<i64: 1, 8, 16, 4>}, {transform_indices = @transform_1, window_bounds = array<i64: 1, 1, 16, 4>}, {transform_indices = @transform_2, window_bounds = array<i64: 1, 1, 16, 4>}, {transform_indices = @transform_3, window_bounds = array<i64: 36, 128>}, {transform_indices = @transform_4, window_bounds = array<i64: 1, 128>}, {transform_indices = @transform_5, window_bounds = array<i64: 1, 128, 128>}]} {
    %c0_i32 = arith.constant 0 : i32
    %0 = arith.cmpi eq, %arg2, %c0_i32 : i32
    %1 = arith.extui %0 : i1 to i32
    %c0_i32_0 = arith.constant 0 : i32
    %2 = arith.cmpi ne, %1, %c0_i32_0 : i32
    scf.if %2 {
      %cst_9 = arith.constant 0.000000e+00 : bf16
      %13 = vector.broadcast %cst_9 : bf16 to vector<10x1x4xbf16>
      %c0_10 = arith.constant 0 : index
      %c0_11 = arith.constant 0 : index
      %c0_12 = arith.constant 0 : index
      %14 = vector.load %arg9[%c0_10, %c0_11, %c0_12] : memref<10x18x4xbf16, #tpu.memory_space<vmem>>, vector<10x1x4xbf16>
      tpu.vector_store %arg9[%c0_10, %c0_11, %c0_12], %13 {strides = array<i32>} : memref<10x18x4xbf16, #tpu.memory_space<vmem>>, vector<10x1x4xbf16>,
      %c0_13 = arith.constant 0 : index
      %c17 = arith.constant 17 : index
      %c0_14 = arith.constant 0 : index
      %15 = vector.load %arg9[%c0_13, %c17, %c0_14] : memref<10x18x4xbf16, #tpu.memory_space<vmem>>, vector<10x1x4xbf16>
      tpu.vector_store %arg9[%c0_13, %c17, %c0_14], %13 {strides = array<i32>} : memref<10x18x4xbf16, #tpu.memory_space<vmem>>, vector<10x1x4xbf16>,
      %c0_15 = arith.constant 0 : index
      %c0_16 = arith.constant 0 : index
      %c0_17 = arith.constant 0 : index
      %c0_18 = arith.constant 0 : index
      %16 = vector.load %arg3[%c0_15, %c0_16, %c0_17, %c0_18] : memref<1x8x16x4xbf16, #tpu.memory_space<vmem>>, vector<1x8x16x4xbf16>
      %17 = vector.shape_cast %16 : vector<1x8x16x4xbf16> to vector<8x16x4xbf16>
      %c1 = arith.constant 1 : index
      %c1_19 = arith.constant 1 : index
      %c0_20 = arith.constant 0 : index
      %18 = vector.load %arg9[%c1, %c1_19, %c0_20] : memref<10x18x4xbf16, #tpu.memory_space<vmem>>, vector<8x16x4xbf16>
      tpu.vector_store %arg9[%c1, %c1_19, %c0_20], %17 {strides = array<i32>} : memref<10x18x4xbf16, #tpu.memory_space<vmem>>, vector<8x16x4xbf16>,
      %c0_i32_21 = arith.constant 0 : i32
      %19 = arith.cmpi sgt, %arg1, %c0_i32_21 : i32
      %c0_22 = arith.constant 0 : index
      %c0_23 = arith.constant 0 : index
      %c0_24 = arith.constant 0 : index
      %c0_25 = arith.constant 0 : index
      %20 = vector.load %arg4[%c0_22, %c0_23, %c0_24, %c0_25] : memref<1x1x16x4xbf16, #tpu.memory_space<vmem>>, vector<1x1x16x4xbf16>
      %21 = vector.shape_cast %20 : vector<1x1x16x4xbf16> to vector<1x16x4xbf16>
      %cst_26 = arith.constant 0.000000e+00 : bf16
      %22 = vector.broadcast %cst_26 : bf16 to vector<1x16x4xbf16>
      %23 = arith.select %19, %21, %22 : vector<1x16x4xbf16>
      %c1_i32 = arith.constant 1 : i32
      %24 = arith.cmpi slt, %arg1, %c1_i32 : i32
      %c0_27 = arith.constant 0 : index
      %c0_28 = arith.constant 0 : index
      %c0_29 = arith.constant 0 : index
      %c0_30 = arith.constant 0 : index
      %25 = vector.load %arg5[%c0_27, %c0_28, %c0_29, %c0_30] : memref<1x1x16x4xbf16, #tpu.memory_space<vmem>>, vector<1x1x16x4xbf16>
      %26 = vector.shape_cast %25 : vector<1x1x16x4xbf16> to vector<1x16x4xbf16>
      %cst_31 = arith.constant 0.000000e+00 : bf16
      %27 = vector.broadcast %cst_31 : bf16 to vector<1x16x4xbf16>
      %28 = arith.select %24, %26, %27 : vector<1x16x4xbf16>
      %c0_32 = arith.constant 0 : index
      %c1_33 = arith.constant 1 : index
      %c0_34 = arith.constant 0 : index
      %29 = vector.load %arg9[%c0_32, %c1_33, %c0_34] : memref<10x18x4xbf16, #tpu.memory_space<vmem>>, vector<1x16x4xbf16>
      tpu.vector_store %arg9[%c0_32, %c1_33, %c0_34], %23 {strides = array<i32>} : memref<10x18x4xbf16, #tpu.memory_space<vmem>>, vector<1x16x4xbf16>,
      %c9 = arith.constant 9 : index
      %c1_35 = arith.constant 1 : index
      %c0_36 = arith.constant 0 : index
      %30 = vector.load %arg9[%c9, %c1_35, %c0_36] : memref<10x18x4xbf16, #tpu.memory_space<vmem>>, vector<1x16x4xbf16>
      tpu.vector_store %arg9[%c9, %c1_35, %c0_36], %28 {strides = array<i32>} : memref<10x18x4xbf16, #tpu.memory_space<vmem>>, vector<1x16x4xbf16>,
      %c0_37 = arith.constant 0 : index
      %c0_38 = arith.constant 0 : index
      %c0_39 = arith.constant 0 : index
      %31 = vector.load %arg9[%c0_37, %c0_38, %c0_39] : memref<10x18x4xbf16, #tpu.memory_space<vmem>>, vector<10x18x4xbf16>
      %32 = vector.extract_strided_slice %31 {offsets = [0, 0, 0], sizes = [8, 16, 4], strides = [1, 1, 1]} : vector<10x18x4xbf16> to vector<8x16x4xbf16>
      %33 = vector.shape_cast %32 : vector<8x16x4xbf16> to vector<128x4xbf16>
      %c0_40 = arith.constant 0 : index
      %c0_41 = arith.constant 0 : index
      %34 = vector.load %arg10[%c0_40, %c0_41] : memref<128x36xbf16, #tpu.memory_space<vmem>>, vector<128x4xbf16>
      tpu.vector_store %arg10[%c0_40, %c0_41], %33 {strides = array<i32>} : memref<128x36xbf16, #tpu.memory_space<vmem>>, vector<128x4xbf16>,
      %35 = vector.extract_strided_slice %31 {offsets = [0, 1, 0], sizes = [8, 16, 4], strides = [1, 1, 1]} : vector<10x18x4xbf16> to vector<8x16x4xbf16>
      %36 = vector.shape_cast %35 : vector<8x16x4xbf16> to vector<128x4xbf16>
      %c0_42 = arith.constant 0 : index
      %c4 = arith.constant 4 : index
      %37 = vector.load %arg10[%c0_42, %c4] : memref<128x36xbf16, #tpu.memory_space<vmem>>, vector<128x4xbf16>
      tpu.vector_store %arg10[%c0_42, %c4], %36 {strides = array<i32>} : memref<128x36xbf16, #tpu.memory_space<vmem>>, vector<128x4xbf16>,
      %38 = vector.extract_strided_slice %31 {offsets = [0, 2, 0], sizes = [8, 16, 4], strides = [1, 1, 1]} : vector<10x18x4xbf16> to vector<8x16x4xbf16>
      %39 = vector.shape_cast %38 : vector<8x16x4xbf16> to vector<128x4xbf16>
      %c0_43 = arith.constant 0 : index
      %c8 = arith.constant 8 : index
      %40 = vector.load %arg10[%c0_43, %c8] : memref<128x36xbf16, #tpu.memory_space<vmem>>, vector<128x4xbf16>
      tpu.vector_store %arg10[%c0_43, %c8], %39 {strides = array<i32>} : memref<128x36xbf16, #tpu.memory_space<vmem>>, vector<128x4xbf16>,
      %41 = vector.extract_strided_slice %31 {offsets = [1, 0, 0], sizes = [8, 16, 4], strides = [1, 1, 1]} : vector<10x18x4xbf16> to vector<8x16x4xbf16>
      %42 = vector.shape_cast %41 : vector<8x16x4xbf16> to vector<128x4xbf16>
      %c0_44 = arith.constant 0 : index
      %c12 = arith.constant 12 : index
      %43 = vector.load %arg10[%c0_44, %c12] : memref<128x36xbf16, #tpu.memory_space<vmem>>, vector<128x4xbf16>
      tpu.vector_store %arg10[%c0_44, %c12], %42 {strides = array<i32>} : memref<128x36xbf16, #tpu.memory_space<vmem>>, vector<128x4xbf16>,
      %44 = vector.extract_strided_slice %31 {offsets = [1, 1, 0], sizes = [8, 16, 4], strides = [1, 1, 1]} : vector<10x18x4xbf16> to vector<8x16x4xbf16>
      %45 = vector.shape_cast %44 : vector<8x16x4xbf16> to vector<128x4xbf16>
      %c0_45 = arith.constant 0 : index
      %c16 = arith.constant 16 : index
      %46 = vector.load %arg10[%c0_45, %c16] : memref<128x36xbf16, #tpu.memory_space<vmem>>, vector<128x4xbf16>
      tpu.vector_store %arg10[%c0_45, %c16], %45 {strides = array<i32>} : memref<128x36xbf16, #tpu.memory_space<vmem>>, vector<128x4xbf16>,
      %47 = vector.extract_strided_slice %31 {offsets = [1, 2, 0], sizes = [8, 16, 4], strides = [1, 1, 1]} : vector<10x18x4xbf16> to vector<8x16x4xbf16>
      %48 = vector.shape_cast %47 : vector<8x16x4xbf16> to vector<128x4xbf16>
      %c0_46 = arith.constant 0 : index
      %c20 = arith.constant 20 : index
      %49 = vector.load %arg10[%c0_46, %c20] : memref<128x36xbf16, #tpu.memory_space<vmem>>, vector<128x4xbf16>
      tpu.vector_store %arg10[%c0_46, %c20], %48 {strides = array<i32>} : memref<128x36xbf16, #tpu.memory_space<vmem>>, vector<128x4xbf16>,
      %50 = vector.extract_strided_slice %31 {offsets = [2, 0, 0], sizes = [8, 16, 4], strides = [1, 1, 1]} : vector<10x18x4xbf16> to vector<8x16x4xbf16>
      %51 = vector.shape_cast %50 : vector<8x16x4xbf16> to vector<128x4xbf16>
      %c0_47 = arith.constant 0 : index
      %c24 = arith.constant 24 : index
      %52 = vector.load %arg10[%c0_47, %c24] : memref<128x36xbf16, #tpu.memory_space<vmem>>, vector<128x4xbf16>
      tpu.vector_store %arg10[%c0_47, %c24], %51 {strides = array<i32>} : memref<128x36xbf16, #tpu.memory_space<vmem>>, vector<128x4xbf16>,
      %53 = vector.extract_strided_slice %31 {offsets = [2, 1, 0], sizes = [8, 16, 4], strides = [1, 1, 1]} : vector<10x18x4xbf16> to vector<8x16x4xbf16>
      %54 = vector.shape_cast %53 : vector<8x16x4xbf16> to vector<128x4xbf16>
      %c0_48 = arith.constant 0 : index
      %c28 = arith.constant 28 : index
      %55 = vector.load %arg10[%c0_48, %c28] : memref<128x36xbf16, #tpu.memory_space<vmem>>, vector<128x4xbf16>
      tpu.vector_store %arg10[%c0_48, %c28], %54 {strides = array<i32>} : memref<128x36xbf16, #tpu.memory_space<vmem>>, vector<128x4xbf16>,
      %56 = vector.extract_strided_slice %31 {offsets = [2, 2, 0], sizes = [8, 16, 4], strides = [1, 1, 1]} : vector<10x18x4xbf16> to vector<8x16x4xbf16>
      %57 = vector.shape_cast %56 : vector<8x16x4xbf16> to vector<128x4xbf16>
      %c0_49 = arith.constant 0 : index
      %c32 = arith.constant 32 : index
      %58 = vector.load %arg10[%c0_49, %c32] : memref<128x36xbf16, #tpu.memory_space<vmem>>, vector<128x4xbf16>
      tpu.vector_store %arg10[%c0_49, %c32], %57 {strides = array<i32>} : memref<128x36xbf16, #tpu.memory_space<vmem>>, vector<128x4xbf16>,
    } else {
    }
    %c0 = arith.constant 0 : index
    %c0_1 = arith.constant 0 : index
    %3 = vector.load %arg10[%c0, %c0_1] : memref<128x36xbf16, #tpu.memory_space<vmem>>, vector<128x36xbf16>
    %c0_2 = arith.constant 0 : index
    %c0_3 = arith.constant 0 : index
    %4 = vector.load %arg6[%c0_2, %c0_3] : memref<36x128xbf16, #tpu.memory_space<vmem>>, vector<36x128xbf16>
    %cst = arith.constant dense<0.000000e+00> : vector<128x128xf32>
    %5 = tpu.matmul %3, %4, %cst {dimension_numbers = #tpu.dot_dimension_numbers<[1], [0], [0], [1], [0, 0, 1, 1], [], []>} : vector<128x36xbf16>, vector<36x128xbf16>, vector<128x128xf32> -> vector<128x128xf32>
    %c0_4 = arith.constant 0 : index
    %c0_5 = arith.constant 0 : index
    %6 = vector.load %arg7[%c0_4, %c0_5] : memref<1x128xf32, #tpu.memory_space<vmem>>, vector<1x128xf32>
    %7 = vector.broadcast %6 : vector<1x128xf32> to vector<128x128xf32>
    %8 = arith.addf %5, %7 : vector<128x128xf32>
    %9 = arith.truncf %8 : vector<128x128xf32> to vector<128x128xbf16>
    %c0_6 = arith.constant 0 : index
    %c0_7 = arith.constant 0 : index
    %c0_8 = arith.constant 0 : index
    %10 = vector.load %arg8[%c0_6, %c0_7, %c0_8] : memref<1x128x128xbf16, #tpu.memory_space<vmem>>, vector<1x128x128xbf16>
    %11 = vector.shape_cast %10 : vector<1x128x128xbf16> to vector<128x128xbf16>
    %12 = vector.shape_cast %9 : vector<128x128xbf16> to vector<1x128x128xbf16>
    tpu.vector_store %arg8[%c0_6, %c0_7, %c0_8], %12 {strides = array<i32>} : memref<1x128x128xbf16, #tpu.memory_space<vmem>>, vector<1x128x128xbf16>,
    return
  }
  func.func @transform_0(%arg0: i32, %arg1: i32, %arg2: i32) -> (i32, i32, i32, i32) {
    %c0_i32 = arith.constant 0 : i32
    %c0_i32_0 = arith.constant 0 : i32
    %c0_i32_1 = arith.constant 0 : i32
    return %arg0, %arg1, %c0_i32, %c0_i32_0 : i32, i32, i32, i32
  }
  func.func @transform_1(%arg0: i32, %arg1: i32, %arg2: i32) -> (i32, i32, i32, i32) {
    %c8_i32 = arith.constant 8 : i32
    %0 = arith.muli %arg1, %c8_i32 : i32
    %c1_i32 = arith.constant 1 : i32
    %1 = arith.subi %0, %c1_i32 : i32
    %c0_i32 = arith.constant 0 : i32
    %2 = arith.maxsi %1, %c0_i32 : i32
    %c0_i32_0 = arith.constant 0 : i32
    %c0_i32_1 = arith.constant 0 : i32
    %c0_i32_2 = arith.constant 0 : i32
    return %arg0, %2, %c0_i32_0, %c0_i32_1 : i32, i32, i32, i32
  }
  func.func @transform_2(%arg0: i32, %arg1: i32, %arg2: i32) -> (i32, i32, i32, i32) {
    %c8_i32 = arith.constant 8 : i32
    %0 = arith.muli %arg1, %c8_i32 : i32
    %c8_i32_0 = arith.constant 8 : i32
    %1 = arith.addi %0, %c8_i32_0 : i32
    %c15_i32 = arith.constant 15 : i32
    %2 = arith.minsi %1, %c15_i32 : i32
    %c0_i32 = arith.constant 0 : i32
    %c0_i32_1 = arith.constant 0 : i32
    %c0_i32_2 = arith.constant 0 : i32
    return %arg0, %2, %c0_i32, %c0_i32_1 : i32, i32, i32, i32
  }
  func.func @transform_3(%arg0: i32, %arg1: i32, %arg2: i32) -> (i32, i32) {
    %c0_i32 = arith.constant 0 : i32
    %c0_i32_0 = arith.constant 0 : i32
    return %c0_i32, %arg2 : i32, i32
  }
  func.func @transform_4(%arg0: i32, %arg1: i32, %arg2: i32) -> (i32, i32) {
    %c0_i32 = arith.constant 0 : i32
    %c0_i32_0 = arith.constant 0 : i32
    return %c0_i32, %arg2 : i32, i32
  }
  func.func @transform_5(%arg0: i32, %arg1: i32, %arg2: i32) -> (i32, i32, i32) {
    %c0_i32 = arith.constant 0 : i32
    return %arg0, %arg1, %arg2 : i32, i32, i32
  }
}

</mosaic_0001>

<llo_original>
// kernel: spectral_norm_conv_forward.2
$region0: #{spectral_norm_conv_forward.2}
  #allocation0 [shape = 'u32[]', space=smem, size = 0x4, offset = 0x4, fixed_abs, tag = 'smem constant byte address 0x4 - core index']
  #allocation1 [shape = 'u32[144,128]{1,0:T(1,128)}', space=vmem, size = 0x12000, scoped, tag = 'internal scratch']
  %s0 = inlined_call_operand.vmem [shape: f32[8,36], index: 0, kind: input, shape index: {}]
  %s1 = inlined_call_operand.vmem [shape: f32[8,1], index: 1, kind: input, shape index: {}]
  %s2 = inlined_call_operand.vmem [shape: f32[1,36], index: 2, kind: input, shape index: {}]
  %s3 = inlined_call_operand.vmem [shape: f32[8,1], index: 3, kind: output, shape index: {0}]
  %s4 = inlined_call_operand.hbm [shape: f32[1,36], index: 4, kind: output, shape index: {1}]
  %s5 = inlined_call_operand.hbm [shape: f32[1,1], index: 5, kind: output, shape index: {2}]
  %6 = xla_tuple %s3, %s4, %s5
  %s7 = sld [smem:[#allocation0]]
  $region38: #{spectral_norm_conv_forward.2} parent=0
    _
  %s9 = ssub.s32 1, %s7
  %s10 = scalar_select 0, %s9, %s7
  $region1: #{spectral_norm_conv_forward.2} parent=0
    #allocation2 [shape = 'u8[512]{0}', space=vmem, size = 0x400, scoped, tag = 'output window, operand 1, single buffered']
    #allocation3 [shape = 's32[1]{0}', space=sflag, size = 0x4, scoped, tag = 'scoped memory for spectral_norm_conv_forward.2']
    #allocation4 [shape = 'u8[512]{0}', space=vmem, size = 0x400, scoped, tag = 'output window, operand 2, single buffered']
    #allocation5 [shape = 's32[1]{0}', space=sflag, size = 0x4, scoped, tag = 'scoped memory for spectral_norm_conv_forward.2']
    %11 = vsyncpa [#allocation3], 0
    %12 = vsyncpa [#allocation5], 0
    // Predicated region
    $region2: #{spectral_norm_conv_forward.2} parent=1 // pred_check
      _
    $region3: #{spectral_norm_conv_forward.2} parent=1 // pred_check_branch
      %14 = sbr.rel (0) target = $region5
    $region4: #{spectral_norm_conv_forward.2} parent=1 // pred_region
      _
    $region5: #{spectral_norm_conv_forward.2} parent=1 // pred_fallthru
      _
    // Predicated region
    $region6: #{spectral_norm_conv_forward.2} parent=1 // pred_check
      _
    $region7: #{spectral_norm_conv_forward.2} parent=1 // pred_check_branch
      %16 = sbr.rel (0) target = $region9
    $region8: #{spectral_norm_conv_forward.2} parent=1 // pred_region
      _
    $region9: #{spectral_norm_conv_forward.2} parent=1 // pred_fallthru
      _
    // Predicated region
    $region10: #{spectral_norm_conv_forward.2} parent=1 // pred_check
      _
    $region11: #{spectral_norm_conv_forward.2} parent=1 // pred_check_branch
      %18 = sbr.rel (0) target = $region13
    $region12: #{spectral_norm_conv_forward.2} parent=1 // pred_region
      _
    $region13: #{spectral_norm_conv_forward.2} parent=1 // pred_fallthru
      _
    %v19 = vld [vmem:[%s0] sm:$0xff]
    %v20 = vld [vmem:[%s1] sm:$0xff]
    %21 = vxpose.xlu0.b32.start [1/16] %v20, 128
    %22 = vxpose.xlu0.b32.cont [2/16] 0.0, 128
    %23 = vxpose.xlu0.b32.cont [3/16] 0.0, 128
    %24 = vxpose.xlu0.b32.cont [4/16] 0.0, 128
    %25 = vxpose.xlu0.b32.cont [5/16] 0.0, 128
    %26 = vxpose.xlu0.b32.cont [6/16] 0.0, 128
    %27 = vxpose.xlu0.b32.cont [7/16] 0.0, 128
    %28 = vxpose.xlu0.b32.cont [8/16] 0.0, 128
    %29 = vxpose.xlu0.b32.cont [9/16] 0.0, 128
    %30 = vxpose.xlu0.b32.cont [10/16] 0.0, 128
    %31 = vxpose.xlu0.b32.cont [11/16] 0.0, 128
    %32 = vxpose.xlu0.b32.cont [12/16] 0.0, 128
    %33 = vxpose.xlu0.b32.cont [13/16] 0.0, 128
    %34 = vxpose.xlu0.b32.cont [14/16] 0.0, 128
    %35 = vxpose.xlu0.b32.cont [15/16] 0.0, 128
    %36 = vxpose.xlu0.b32.end [16/16] 0.0, 128
    %v37 = vpop.trf.xlu0
    %v38 = vpop.trf.xlu0
    %v39 = vpop.trf.xlu0
    %v40 = vpop.trf.xlu0
    %v41 = vpop.trf.xlu0
    %v42 = vpop.trf.xlu0
    %v43 = vpop.trf.xlu0
    %v44 = vpop.trf.xlu0
    %v45 = vpop.trf.xlu0
    %v46 = vpop.trf.xlu0
    %v47 = vpop.trf.xlu0
    %v48 = vpop.trf.xlu0
    %v49 = vpop.trf.xlu0
    %v50 = vpop.trf.xlu0
    %v51 = vpop.trf.xlu0
    %v52 = vpop.trf.xlu0
    %vm53 = vcmask 64512
    %v55 = vsel %vm53, %v37, 0
    %57 = vmatprep.subr.mxu0 0.0
    %58 = vmatpush1.msra.mxu0 %v19
    %59 = vmatprep.subr.mxu0 0.0
    %60 = vmatpush1.msra.mxu0 0.0
    %61 = vmatprep.subr.mxu0 0.0
    %62 = vmatpush1.msra.mxu0 0.0
    %63 = vmatprep.subr.mxu0 0.0
    %64 = vmatpush1.msra.mxu0 0.0
    %65 = vmatprep.subr.mxu0 0.0
    %66 = vmatpush1.msra.mxu0 0.0
    %67 = vmatprep.subr.mxu0 0.0
    %68 = vmatpush1.msra.mxu0 0.0
    %69 = vmatprep.subr.mxu0 0.0
    %70 = vmatpush1.msra.mxu0 0.0
    %71 = vmatprep.subr.mxu0 0.0
    %72 = vmatpush1.msra.mxu0 0.0
    %73 = vmatprep.subr.mxu0 0.0
    %74 = vmatpush1.msra.mxu0 0.0
    %75 = vmatprep.subr.mxu0 0.0
    %76 = vmatpush1.msra.mxu0 0.0
    %77 = vmatprep.subr.mxu0 0.0
    %78 = vmatpush1.msra.mxu0 0.0
    %79 = vmatprep.subr.mxu0 0.0
    %80 = vmatpush1.msra.mxu0 0.0
    %81 = vmatprep.subr.mxu0 0.0
    %82 = vmatpush1.msra.mxu0 0.0
    %83 = vmatprep.subr.mxu0 0.0
    %84 = vmatpush1.msra.mxu0 0.0
    %85 = vmatprep.subr.mxu0 0.0
    %86 = vmatpush1.msra.mxu0 0.0
    %87 = vmatprep.subr.mxu0 0.0
    %88 = vmatpush1.msra.mxu0 0.0
    %89 = vmatprep.subr.mxu0 0.0
    %90 = vmatpush1.msra.mxu0 0.0
    %91 = vmatprep.subr.mxu0 0.0
    %92 = vmatpush1.msra.mxu0 0.0
    %93 = vmatprep.subr.mxu0 0.0
    %94 = vmatpush1.msra.mxu0 0.0
    %95 = vmatprep.subr.mxu0 0.0
    %96 = vmatpush1.msra.mxu0 0.0
    %97 = vmatprep.subr.mxu0 0.0
    %98 = vmatpush1.msra.mxu0 0.0
    %99 = vmatprep.subr.mxu0 0.0
    %100 = vmatpush1.msra.mxu0 0.0
    %101 = vmatprep.subr.mxu0 0.0
    %102 = vmatpush1.msra.mxu0 0.0
    %103 = vmatprep.subr.mxu0 0.0
    %104 = vmatpush1.msra.mxu0 0.0
    %105 = vmatprep.subr.mxu0 0.0
    %106 = vmatpush1.msra.mxu0 0.0
    %107 = vmatprep.subr.mxu0 0.0
    %108 = vmatpush1.msra.mxu0 0.0
    %109 = vmatprep.subr.mxu0 0.0
    %110 = vmatpush1.msra.mxu0 0.0
    %111 = vmatprep.subr.mxu0 0.0
    %112 = vmatpush1.msra.mxu0 0.0
    %113 = vmatprep.subr.mxu0 0.0
    %114 = vmatpush1.msra.mxu0 0.0
    %115 = vmatprep.subr.mxu0 0.0
    %116 = vmatpush1.msra.mxu0 0.0
    %117 = vmatprep.subr.mxu0 0.0
    %118 = vmatpush1.msra.mxu0 0.0
    %119 = vmatprep.subr.mxu0 0.0
    %120 = vmatpush1.msra.mxu0 0.0
    %121 = vmatprep.mubr.f32.mxu0 0.0
    %122 = vmatmul.mubr.f32.gmra.mrb[0].mxu0 %v55
    %v123 = vpop.f32.mrb[0].mxu0
    %v124 = vadd.f32 0.0, %v123
    %v125 = vpop.f32.mrb[0].mxu0
    %126 = vdwg.mxu0
    %v127 = vmul.f32 %v124, %v124
    %vm128 = vcmask 286720
    %v129 = vsel %vm128, %v127, 0.0
    %130 = vadd.xlane.f32.xlu0 %v129
    %v131 = vpop.xlane.xlu0 %130
    %v132 = vrot.slane %v131, 4
    %v133 = vadd.f32 %v131, %v132
    %v134 = vrot.slane %v133, 2
    %v135 = vadd.f32 %v133, %v134
    %v136 = vrot.slane %v135, 1
    %v137 = vadd.f32 %v135, %v136
    %s138 = vtos %v137
    %v139 = vstv %s138
    %v140 = vrsqrt.pop %v139
    %v141 = vmul.f32 %v139, %v140
    %vm142 = vcmp.eq.f32.partialorder %v139, inf
    %v143 = vsel %vm142, %v139, %v141
    %vm144 = vcmp.eq.f32.partialorder %v139, 0.0
    %v145 = vand.u32 %v139, 2147483648
    %v146 = vsel %vm144, %v145, %v143
    %s147 = vtos %v146
    %s148 = sadd.f32 %s147, 1e-12
    %v149 = vstv %s148
    %v150 = vrcp.pop %v149
    %s151 = vtos %v150
    %v152 = vstv %s151
    %v153 = vmul.f32 %v124, %v152
    %v154 = vlaneseq
    %v155 = vshrl.u32 %v154, 7
    %v156 = vsub.s32 0, %v155
    %v157 = vrot.slane %v153, %v156
    %v158 = vmul.f32 %v19, %v157
    %vm159 = vcmask 293888
    %v160 = vsel %vm159, %v158, 0.0
    %161 = vadd.xlane.f32.xlu0 %v160
    %v162 = vpop.xlane.xlu0 %161
    %v163 = vmul.f32 %v162, %v162
    %vm164 = vcmask 7168
    %v165 = vsel %vm164, %v163, 0.0
    %166 = vadd.xlane.f32.xlu0 %v165
    %v167 = vpop.xlane.xlu0 %166
    %v168 = vrot.slane %v167, 4
    %v169 = vadd.f32 %v167, %v168
    %v170 = vrot.slane %v169, 2
    %v171 = vadd.f32 %v169, %v170
    %v172 = vrot.slane %v171, 1
    %v173 = vadd.f32 %v171, %v172
    %s174 = vtos %v173
    %v175 = vstv %s174
    %v176 = vrsqrt.pop %v175
    %v177 = vmul.f32 %v175, %v176
    %vm178 = vcmp.eq.f32.partialorder %v175, inf
    %v179 = vsel %vm178, %v175, %v177
    %vm180 = vcmp.eq.f32.partialorder %v175, 0.0
    %v181 = vand.u32 %v175, 2147483648
    %v182 = vsel %vm180, %v181, %v179
    %s183 = vtos %v182
    %s184 = sadd.f32 %s183, 1e-12
    %v185 = vstv %s184
    %v186 = vrcp.pop %v185
    %s187 = vtos %v186
    %v188 = vstv %s187
    %v189 = vmul.f32 %v162, %v188
    %v190 = vmul.f32 %v189, %v162
    %v191 = vsel %vm164, %v190, 0.0
    %192 = vadd.xlane.f32.xlu0 %v191
    %v193 = vpop.xlane.xlu0 %192
    %v194 = vrot.slane %v193, 4
    %v195 = vadd.f32 %v193, %v194
    %v196 = vrot.slane %v195, 2
    %v197 = vadd.f32 %v195, %v196
    %v198 = vrot.slane %v197, 1
    %v199 = vadd.f32 %v197, %v198
    %s200 = vtos %v199
    %v201 = vstv %s200
    %vm202 = vcmask 0
    %203 = vst.msk [vmem:[#allocation4] sm:$0x1] %vm202, %v201
    %204 = vst.msk [vmem:[%s3] sm:$0xff] %vm164, %v189
    %205 = vst.msk [vmem:[#allocation2] sm:$0x1] %vm128, %v153
    // Predicated region
    $region14: #{spectral_norm_conv_forward.2} parent=1 // pred_check
      _
    $region15: #{spectral_norm_conv_forward.2} parent=1 // pred_check_branch
      %207 = sbr.rel (0) target = $region17
    $region16: #{spectral_norm_conv_forward.2} parent=1 // pred_region
      _
    $region17: #{spectral_norm_conv_forward.2} parent=1 // pred_fallthru
      _
    // Predicated region
    $region18: #{spectral_norm_conv_forward.2} parent=1 // pred_check
      _
    $region19: #{spectral_norm_conv_forward.2} parent=1 // pred_check_branch
      %209 = sbr.rel (0) target = $region21
    $region20: #{spectral_norm_conv_forward.2} parent=1 // pred_region
      %s211 = ssub.s32 16, 16
      %212 = vsyncadd [#allocation3], %s211
      %s214 = sshll.u32 [#allocation2], 4
      %s215 = int_to_ptr.vmem [resolvable:$true] %s214
      %217 = dma.vmem_to_hbm [thread:$0]  %s215, 16, %s4, [#allocation3]
    $region21: #{spectral_norm_conv_forward.2} parent=1 // pred_fallthru
      _
    // Predicated region
    $region22: #{spectral_norm_conv_forward.2} parent=1 // pred_check
      _
    $region23: #{spectral_norm_conv_forward.2} parent=1 // pred_check_branch
      %219 = sbr.rel (0) target = $region25
    $region24: #{spectral_norm_conv_forward.2} parent=1 // pred_region
      %s221 = ssub.s32 16, 16
      %222 = vsyncadd [#allocation5], %s221
      %s224 = sshll.u32 [#allocation4], 4
      %s225 = int_to_ptr.vmem [resolvable:$true] %s224
      %227 = dma.vmem_to_hbm [thread:$0]  %s225, 16, %s5, [#allocation5]
    $region25: #{spectral_norm_conv_forward.2} parent=1 // pred_fallthru
      _
    // Predicated region
    $region26: #{spectral_norm_conv_forward.2} parent=1 // pred_check
      _
    $region27: #{spectral_norm_conv_forward.2} parent=1 // pred_check_branch
      %229 = sbr.rel (0) target = $region29
    $region28: #{spectral_norm_conv_forward.2} parent=1 // pred_region
      _
    $region29: #{spectral_norm_conv_forward.2} parent=1 // pred_fallthru
      _
    // Predicated region
    $region30: #{spectral_norm_conv_forward.2} parent=1 // pred_check
      _
    $region31: #{spectral_norm_conv_forward.2} parent=1 // pred_check_branch
      %231 = sbr.rel (0) target = $region33
    $region32: #{spectral_norm_conv_forward.2} parent=1 // pred_region
      %232 = dma.done [#allocation3], 16
    $region33: #{spectral_norm_conv_forward.2} parent=1 // pred_fallthru
      _
    // Predicated region
    $region34: #{spectral_norm_conv_forward.2} parent=1 // pred_check
      _
    $region35: #{spectral_norm_conv_forward.2} parent=1 // pred_check_branch
      %234 = sbr.rel (0) target = $region37
    $region36: #{spectral_norm_conv_forward.2} parent=1 // pred_region
      %235 = dma.done [#allocation5], 16
    $region37: #{spectral_norm_conv_forward.2} parent=1 // pred_fallthru
      _
    %236 = vsyncpa [#allocation3], 1
    %237 = vsyncpa [#allocation5], 1

// kernel: spectral_norm_conv_forward.3
$region0: #{spectral_norm_conv_forward.3}
  #allocation0 [shape = 'u32[]', space=smem, size = 0x4, offset = 0x4, fixed_abs, tag = 'smem constant byte address 0x4 - core index']
  #allocation1 [shape = 'u32[144,128]{1,0:T(1,128)}', space=vmem, size = 0x12000, scoped, tag = 'internal scratch']
  #allocation2 [shape = 'bf16[10,18,4]{2,1,0:T(8,128)(2,1)}', space=vmem, size = 0xf000, scoped, tag = 'scratch operand']
  #allocation3 [shape = 'bf16[128,36]{1,0:T(16,128)(2,1)}', space=vmem, size = 0x8000, scoped, tag = 'scratch operand']
  %s0 = inlined_call_operand.vmem [shape: bf16[2,16,16,4], index: 0, kind: input, shape index: {}, may-alias: {0,1,2}]
  %s1 = inlined_call_operand.vmem [shape: bf16[2,16,16,4], index: 1, kind: input, shape index: {}, may-alias: {0,1,2}]
  %s2 = inlined_call_operand.vmem [shape: bf16[2,16,16,4], index: 2, kind: input, shape index: {}, may-alias: {0,1,2}]
  %s3 = inlined_call_operand.vmem [shape: bf16[36,128], index: 3, kind: input, shape index: {}]
  %s4 = inlined_call_operand.vmem [shape: f32[1,128], index: 4, kind: input, shape index: {}]
  %s5 = inlined_call_operand.vmem [shape: bf16[2,256,128], index: 5, kind: output, shape index: {}]
  %s6 = sld [smem:[#allocation0]]
  $region57: #{spectral_norm_conv_forward.3} parent=0
    _
  %s8 = ssub.s32 1, %s6
  %s9 = scalar_select 0, %s8, %s6
  loop: start=0, step=1, limit=6
  $region2: #{spectral_norm_conv_forward.3} parent=0 // loop_pre_header
    _
  $region3: #{spectral_norm_conv_forward.3} parent=0 // loop_header
    %s11 = sphi 0, %s15
    %p12 = scmp.ge.s32.totalorder %s11, 6
    %s18 = sphi 0, %s37
    %s19 = sphi 0, %s33
    %s20 = sphi 0, %s29
    %s21 = sphi 0, %s18
    %s22 = sphi 0, %s19
    %s23 = sphi 0, %s20
    %s24 = sphi 0, %s21
    %s25 = sphi 0, %s22
    %s26 = sphi 0, %s23
    %s42 = sphi 0, %s44
    %s45 = sphi 0, %s42
    %s46 = sphi 0, %s45
    %s62 = sphi 0, %s46
    %s78 = sphi 0, %s80
    %s81 = sphi 0, %s78
    %s82 = sphi 0, %s81
    %s98 = sphi 0, %s82
    %s114 = sphi 0, %s116
    %s117 = sphi 0, %s114
    %s118 = sphi 0, %s117
    %s134 = sphi 0, %s118
    %s140 = sphi 0, %s142
    %s143 = sphi 0, %s140
    %s144 = sphi 0, %s143
    %s160 = sphi 0, %s144
    %s166 = sphi 0, %s168
    %s169 = sphi 0, %s166
    %s170 = sphi 0, %s169
    %s186 = sphi 0, %s170
    %s196 = sphi 0, %s198
    %s199 = sphi 0, %s196
    %s200 = sphi 0, %s199
    %s216 = sphi 0, %s200
  $region4: #{spectral_norm_conv_forward.3} parent=0 // loop_header_branch
    %14 = sbr.rel (%p12) target = $region8
  $region5: #{spectral_norm_conv_forward.3} parent=0 // loop_body
    %s16 = ssub.s32 %s11, 1
    %s17 = ssub.s32 %s11, 2
    %s27 = sadd.s32 1, %s20
    %p28 = scmp.ge.s32.totalorder %s27, 1
    %s29 = scalar_select %p28, 0, %s27
    %s30 = sadd.s32 1, %s19
    %s31 = scalar_select %p28, %s30, %s19
    %p32 = scmp.ge.s32.totalorder %s31, 2
    %s33 = scalar_select %p32, 0, %s31
    %s34 = sadd.s32 1, %s18
    %s35 = scalar_select %p32, %s34, %s18
    %p36 = scmp.ge.s32.totalorder %s35, 2
    %s37 = scalar_select %p36, 0, %s35
    %s38 = ssub.s32 %s18, %s37
    %s39 = ssub.s32 %s19, %s33
    %s40 = sor.u32 %s38, %s39
    %p41 = scmp.eq.s32.totalorder %s40, 0
    %s43 = sadd.s32 %s42, 1
    %s44 = scalar_select %p41, %s42, %s43
    %p47 = pneg %p41
    %p48 = scmp.eq.s32.totalorder %s11, 3
    %p49 = por %p47, %p48
    %p50 = scmp.ne.s32.totalorder %s42, %s45
    %p51 = scmp.eq.s32.totalorder %s11, 0
    %p52 = por %p50, %p51
    %p53 = scmp.ne.s32.totalorder %s42, %s45
    %p54 = scmp.eq.s32.totalorder %s16, 3
    %p55 = por %p53, %p54
    %p56 = scmp.ne.s32.totalorder %s45, %s46
    %p57 = scmp.eq.s32.totalorder %s16, 0
    %p58 = por %p56, %p57
    %p59 = scmp.ne.s32.totalorder %s45, %s46
    %p60 = scmp.eq.s32.totalorder %s17, 3
    %p61 = por %p59, %p60
    %p63 = scmp.ne.s32.totalorder %s46, %s62
    %p64 = scmp.eq.s32.totalorder %s17, 0
    %p65 = por %p63, %p64
    %s66 = smul.u32 %s19, 8
    %s67 = ssub.s32 %s66, 1
    %p68 = scmp.gt.s32.totalorder %s67, 0
    %s69 = scalar_select %p68, %s67, 0
    %s70 = smul.u32 %s33, 8
    %s71 = ssub.s32 %s70, 1
    %p72 = scmp.gt.s32.totalorder %s71, 0
    %s73 = scalar_select %p72, %s71, 0
    %s74 = ssub.s32 %s18, %s37
    %s75 = ssub.s32 %s69, %s73
    %s76 = sor.u32 %s74, %s75
    %p77 = scmp.eq.s32.totalorder %s76, 0
    %s79 = sadd.s32 %s78, 1
    %s80 = scalar_select %p77, %s78, %s79
    %p83 = pneg %p77
    %p84 = scmp.eq.s32.totalorder %s11, 3
    %p85 = por %p83, %p84
    %p86 = scmp.ne.s32.totalorder %s78, %s81
    %p87 = scmp.eq.s32.totalorder %s11, 0
    %p88 = por %p86, %p87
    %p89 = scmp.ne.s32.totalorder %s78, %s81
    %p90 = scmp.eq.s32.totalorder %s16, 3
    %p91 = por %p89, %p90
    %p92 = scmp.ne.s32.totalorder %s81, %s82
    %p93 = scmp.eq.s32.totalorder %s16, 0
    %p94 = por %p92, %p93
    %p95 = scmp.ne.s32.totalorder %s81, %s82
    %p96 = scmp.eq.s32.totalorder %s17, 3
    %p97 = por %p95, %p96
    %p99 = scmp.ne.s32.totalorder %s82, %s98
    %p100 = scmp.eq.s32.totalorder %s17, 0
    %p101 = por %p99, %p100
    %s102 = smul.u32 %s19, 8
    %s103 = sadd.s32 %s102, 8
    %p104 = scmp.lt.s32.totalorder %s103, 15
    %s105 = scalar_select %p104, %s103, 15
    %s106 = smul.u32 %s33, 8
    %s107 = sadd.s32 %s106, 8
    %p108 = scmp.lt.s32.totalorder %s107, 15
    %s109 = scalar_select %p108, %s107, 15
    %s110 = ssub.s32 %s18, %s37
    %s111 = ssub.s32 %s105, %s109
    %s112 = sor.u32 %s110, %s111
    %p113 = scmp.eq.s32.totalorder %s112, 0
    %s115 = sadd.s32 %s114, 1
    %s116 = scalar_select %p113, %s114, %s115
    %p119 = pneg %p113
    %p120 = scmp.eq.s32.totalorder %s11, 3
    %p121 = por %p119, %p120
    %p122 = scmp.ne.s32.totalorder %s114, %s117
    %p123 = scmp.eq.s32.totalorder %s11, 0
    %p124 = por %p122, %p123
    %p125 = scmp.ne.s32.totalorder %s114, %s117
    %p126 = scmp.eq.s32.totalorder %s16, 3
    %p127 = por %p125, %p126
    %p128 = scmp.ne.s32.totalorder %s117, %s118
    %p129 = scmp.eq.s32.totalorder %s16, 0
    %p130 = por %p128, %p129
    %p131 = scmp.ne.s32.totalorder %s117, %s118
    %p132 = scmp.eq.s32.totalorder %s17, 3
    %p133 = por %p131, %p132
    %p135 = scmp.ne.s32.totalorder %s118, %s134
    %p136 = scmp.eq.s32.totalorder %s17, 0
    %p137 = por %p135, %p136
    %s138 = ssub.s32 %s20, %s29
    %p139 = scmp.eq.s32.totalorder %s138, 0
    %s141 = sadd.s32 %s140, 1
    %s142 = scalar_select %p139, %s140, %s141
    %p145 = pneg %p139
    %p146 = scmp.eq.s32.totalorder %s11, 3
    %p147 = por %p145, %p146
    %p148 = scmp.ne.s32.totalorder %s140, %s143
    %p149 = scmp.eq.s32.totalorder %s11, 0
    %p150 = por %p148, %p149
    %p151 = scmp.ne.s32.totalorder %s140, %s143
    %p152 = scmp.eq.s32.totalorder %s16, 3
    %p153 = por %p151, %p152
    %p154 = scmp.ne.s32.totalorder %s143, %s144
    %p155 = scmp.eq.s32.totalorder %s16, 0
    %p156 = por %p154, %p155
    %p157 = scmp.ne.s32.totalorder %s143, %s144
    %p158 = scmp.eq.s32.totalorder %s17, 3
    %p159 = por %p157, %p158
    %p161 = scmp.ne.s32.totalorder %s144, %s160
    %p162 = scmp.eq.s32.totalorder %s17, 0
    %p163 = por %p161, %p162
    %s164 = ssub.s32 %s20, %s29
    %p165 = scmp.eq.s32.totalorder %s164, 0
    %s167 = sadd.s32 %s166, 1
    %s168 = scalar_select %p165, %s166, %s167
    %p171 = pneg %p165
    %p172 = scmp.eq.s32.totalorder %s11, 3
    %p173 = por %p171, %p172
    %p174 = scmp.ne.s32.totalorder %s166, %s169
    %p175 = scmp.eq.s32.totalorder %s11, 0
    %p176 = por %p174, %p175
    %p177 = scmp.ne.s32.totalorder %s166, %s169
    %p178 = scmp.eq.s32.totalorder %s16, 3
    %p179 = por %p177, %p178
    %p180 = scmp.ne.s32.totalorder %s169, %s170
    %p181 = scmp.eq.s32.totalorder %s16, 0
    %p182 = por %p180, %p181
    %p183 = scmp.ne.s32.totalorder %s169, %s170
    %p184 = scmp.eq.s32.totalorder %s17, 3
    %p185 = por %p183, %p184
    %p187 = scmp.ne.s32.totalorder %s170, %s186
    %p188 = scmp.eq.s32.totalorder %s17, 0
    %p189 = por %p187, %p188
    %s190 = ssub.s32 %s18, %s37
    %s191 = ssub.s32 %s19, %s33
    %s192 = sor.u32 %s190, %s191
    %s193 = ssub.s32 %s20, %s29
    %s194 = sor.u32 %s192, %s193
    %p195 = scmp.eq.s32.totalorder %s194, 0
    %s197 = sadd.s32 %s196, 1
    %s198 = scalar_select %p195, %s196, %s197
    %p201 = pneg %p195
    %p202 = scmp.eq.s32.totalorder %s11, 3
    %p203 = por %p201, %p202
    %p204 = scmp.ne.s32.totalorder %s196, %s199
    %p205 = scmp.eq.s32.totalorder %s11, 0
    %p206 = por %p204, %p205
    %p207 = scmp.ne.s32.totalorder %s196, %s199
    %p208 = scmp.eq.s32.totalorder %s16, 3
    %p209 = por %p207, %p208
    %p210 = scmp.ne.s32.totalorder %s199, %s200
    %p211 = scmp.eq.s32.totalorder %s16, 0
    %p212 = por %p210, %p211
    %p213 = scmp.ne.s32.totalorder %s199, %s200
    %p214 = scmp.eq.s32.totalorder %s17, 3
    %p215 = por %p213, %p214
    %p217 = scmp.ne.s32.totalorder %s200, %s216
    %p218 = scmp.eq.s32.totalorder %s17, 0
    %p219 = por %p217, %p218
    %p220 = scmp.le.s32.totalorder 1, %s11
    %p221 = scmp.lt.s32.totalorder %s11, 5
    %p222 = pnand %p220, %p221
    %p223 = pneg %p222
    // Predicated region
    $region9: #{spectral_norm_conv_forward.3} parent=5 // pred_check
      _
    $region10: #{spectral_norm_conv_forward.3} parent=5 // pred_check_branch
      %225 = sbr.rel (%p222) target = $region12
    $region11: #{spectral_norm_conv_forward.3} parent=5 // pred_region
      %s226 = ssub.s32 %s11, 1
      // Predicated region
      $region13: #{spectral_norm_conv_forward.3} parent=11 // pred_check
        %p227 = pneg %p156
      $region14: #{spectral_norm_conv_forward.3} parent=11 // pred_check_branch
        %229 = sbr.rel (%p227) target = $region16
      $region15: #{spectral_norm_conv_forward.3} parent=11 // pred_region
        %p230 = scmp.lt.s32.totalorder %s23, 0
        %s231 = scalar_select %p230, %s23, 0
        %s232 = smul.addr %s231, 4
        %s233 = scalar_lea.vmem %s3, %s232
      $region16: #{spectral_norm_conv_forward.3} parent=11 // pred_fallthru
        _
      // Predicated region
      $region17: #{spectral_norm_conv_forward.3} parent=11 // pred_check
        %p234 = pneg %p182
      $region18: #{spectral_norm_conv_forward.3} parent=11 // pred_check_branch
        %236 = sbr.rel (%p234) target = $region20
      $region19: #{spectral_norm_conv_forward.3} parent=11 // pred_region
        %p237 = scmp.lt.s32.totalorder %s23, 0
        %s238 = scalar_select %p237, %s23, 0
        %s239 = scalar_lea.vmem %s4, %s238
      $region20: #{spectral_norm_conv_forward.3} parent=11 // pred_fallthru
        _
    $region12: #{spectral_norm_conv_forward.3} parent=5 // pred_fallthru
      _
    %p240 = scmp.lt.s32.totalorder %s11, 4
    // Predicated region
    $region21: #{spectral_norm_conv_forward.3} parent=5 // pred_check
      %p241 = pneg %p240
    $region22: #{spectral_norm_conv_forward.3} parent=5 // pred_check_branch
      %243 = sbr.rel (%p241) target = $region24
    $region23: #{spectral_norm_conv_forward.3} parent=5 // pred_region
      // Predicated region
      $region25: #{spectral_norm_conv_forward.3} parent=23 // pred_check
        %p244 = pneg %p52
      $region26: #{spectral_norm_conv_forward.3} parent=23 // pred_check_branch
        %246 = sbr.rel (%p244) target = $region28
      $region27: #{spectral_norm_conv_forward.3} parent=23 // pred_region
        %s247 = smul.u32 8, %s19
        %p248 = scmp.lt.s32.totalorder %s18, 1
        %s249 = scalar_select %p248, %s18, 1
        %p250 = scmp.lt.s32.totalorder %s247, 15
        %s251 = scalar_select %p250, %s247, 15
        %s252 = smul.addr %s251, 2
        %s253 = smul.addr %s249, 32
        %s254 = sadd.s32 %s252, %s253
        %s255 = smul.addr %s254, 4
        %s256 = scalar_lea.vmem %s0, %s255
        %s257 = smul.u32 8, %s19
      $region28: #{spectral_norm_conv_forward.3} parent=23 // pred_fallthru
        _
      // Predicated region
      $region29: #{spectral_norm_conv_forward.3} parent=23 // pred_check
        %p258 = pneg %p88
      $region30: #{spectral_norm_conv_forward.3} parent=23 // pred_check_branch
        %260 = sbr.rel (%p258) target = $region32
      $region31: #{spectral_norm_conv_forward.3} parent=23 // pred_region
        %s261 = smul.u32 %s19, 8
        %s262 = ssub.s32 %s261, 1
        %p263 = scmp.gt.s32.totalorder %s262, 0
        %s264 = scalar_select %p263, %s262, 0
        %p265 = scmp.lt.s32.totalorder %s18, 1
        %s266 = scalar_select %p265, %s18, 1
        %p267 = scmp.lt.s32.totalorder %s264, 15
        %s268 = scalar_select %p267, %s264, 15
        %s269 = smul.addr %s268, 2
        %s270 = smul.addr %s266, 32
        %s271 = sadd.s32 %s269, %s270
        %s272 = smul.addr %s271, 4
        %s273 = scalar_lea.vmem %s1, %s272
        %s274 = smul.u32 %s19, 8
        %s275 = ssub.s32 %s274, 1
        %p276 = scmp.gt.s32.totalorder %s275, 0
        %s277 = scalar_select %p276, %s275, 0
      $region32: #{spectral_norm_conv_forward.3} parent=23 // pred_fallthru
        _
      // Predicated region
      $region33: #{spectral_norm_conv_forward.3} parent=23 // pred_check
        %p278 = pneg %p124
      $region34: #{spectral_norm_conv_forward.3} parent=23 // pred_check_branch
        %280 = sbr.rel (%p278) target = $region36
      $region35: #{spectral_norm_conv_forward.3} parent=23 // pred_region
        %s281 = smul.u32 %s19, 8
        %s282 = sadd.s32 %s281, 8
        %p283 = scmp.lt.s32.totalorder %s282, 15
        %s284 = scalar_select %p283, %s282, 15
        %p285 = scmp.lt.s32.totalorder %s18, 1
        %s286 = scalar_select %p285, %s18, 1
        %p287 = scmp.lt.s32.totalorder %s284, 15
        %s288 = scalar_select %p287, %s284, 15
        %s289 = smul.addr %s288, 2
        %s290 = smul.addr %s286, 32
        %s291 = sadd.s32 %s289, %s290
        %s292 = smul.addr %s291, 4
        %s293 = scalar_lea.vmem %s2, %s292
        %s294 = smul.u32 %s19, 8
        %s295 = sadd.s32 %s294, 8
        %p296 = scmp.lt.s32.totalorder %s295, 15
        %s297 = scalar_select %p296, %s295, 15
      $region36: #{spectral_norm_conv_forward.3} parent=23 // pred_fallthru
        _
    $region24: #{spectral_norm_conv_forward.3} parent=5 // pred_fallthru
      _
    %p298 = scmp.le.s32.totalorder 1, %s11
    %p299 = scmp.lt.s32.totalorder %s11, 5
    %p300 = pnand %p298, %p299
    %p301 = pneg %p300
    // Predicated region
    $region37: #{spectral_norm_conv_forward.3} parent=5 // pred_check
      _
    $region38: #{spectral_norm_conv_forward.3} parent=5 // pred_check_branch
      %303 = sbr.rel (%p300) target = $region40
    $region39: #{spectral_norm_conv_forward.3} parent=5 // pred_region
      %s304 = ssub.s32 %s11, 1
      %s305 = smul.u32 8, %s22
      %p306 = scmp.lt.s32.totalorder %s21, 1
      %s307 = scalar_select %p306, %s21, 1
      %p308 = scmp.lt.s32.totalorder %s305, 15
      %s309 = scalar_select %p308, %s305, 15
      %s310 = smul.addr %s309, 2
      %s311 = smul.addr %s307, 32
      %s312 = sadd.s32 %s310, %s311
      %s313 = smul.addr %s312, 4
      %s314 = scalar_lea.vmem %s0, %s313
      %p315 = pneg %p58
      %p316 = pneg %p55
      %s317 = smul.u32 %s22, 8
      %s318 = ssub.s32 %s317, 1
      %p319 = scmp.gt.s32.totalorder %s318, 0
      %s320 = scalar_select %p319, %s318, 0
      %p321 = scmp.lt.s32.totalorder %s21, 1
      %s322 = scalar_select %p321, %s21, 1
      %p323 = scmp.lt.s32.totalorder %s320, 15
      %s324 = scalar_select %p323, %s320, 15
      %s325 = smul.addr %s324, 2
      %s326 = smul.addr %s322, 32
      %s327 = sadd.s32 %s325, %s326
      %s328 = smul.addr %s327, 4
      %s329 = scalar_lea.vmem %s1, %s328
      %p330 = pneg %p94
      %p331 = pneg %p91
      %s332 = smul.u32 %s22, 8
      %s333 = sadd.s32 %s332, 8
      %p334 = scmp.lt.s32.totalorder %s333, 15
      %s335 = scalar_select %p334, %s333, 15
      %p336 = scmp.lt.s32.totalorder %s21, 1
      %s337 = scalar_select %p336, %s21, 1
      %p338 = scmp.lt.s32.totalorder %s335, 15
      %s339 = scalar_select %p338, %s335, 15
      %s340 = smul.addr %s339, 2
      %s341 = smul.addr %s337, 32
      %s342 = sadd.s32 %s340, %s341
      %s343 = smul.addr %s342, 4
      %s344 = scalar_lea.vmem %s2, %s343
      %p345 = pneg %p130
      %p346 = pneg %p127
      %p347 = scmp.lt.s32.totalorder %s23, 0
      %s348 = scalar_select %p347, %s23, 0
      %s349 = smul.addr %s348, 4
      %s350 = scalar_lea.vmem %s3, %s349
      %p351 = pneg %p156
      %p352 = pneg %p153
      %p353 = scmp.lt.s32.totalorder %s23, 0
      %s354 = scalar_select %p353, %s23, 0
      %s355 = scalar_lea.vmem %s4, %s354
      %p356 = pneg %p182
      %p357 = pneg %p179
      %p358 = pneg %p212
      %p359 = pneg %p209
      %s360 = smul.u32 16, %s22
      %p361 = scmp.lt.s32.totalorder %s21, 1
      %s362 = scalar_select %p361, %s21, 1
      %p363 = scmp.lt.s32.totalorder %s360, 31
      %s364 = scalar_select %p363, %s360, 31
      %p365 = scmp.lt.s32.totalorder %s23, 0
      %s366 = scalar_select %p365, %s23, 0
      %s367 = sadd.s32 %s366, %s364
      %s368 = smul.addr %s362, 32
      %s369 = sadd.s32 %s367, %s368
      %s370 = smul.addr %s369, 4
      %s371 = scalar_lea.vmem %s5, %s370
      %s372 = smul.u32 8, %s22
      %p373 = scmp.lt.s32.totalorder %s21, 1
      %s374 = scalar_select %p373, %s21, 1
      %p375 = scmp.lt.s32.totalorder %s372, 15
      %s376 = scalar_select %p375, %s372, 15
      %s377 = smul.addr %s376, 2
      %s378 = smul.addr %s374, 32
      %s379 = sadd.s32 %s377, %s378
      %s380 = smul.addr %s379, 4
      %s381 = scalar_lea.vmem %s0, %s380
      %s382 = smul.u32 8, %s22
      %s383 = smul.u32 %s22, 8
      %s384 = ssub.s32 %s383, 1
      %p385 = scmp.gt.s32.totalorder %s384, 0
      %s386 = scalar_select %p385, %s384, 0
      %p387 = scmp.lt.s32.totalorder %s21, 1
      %s388 = scalar_select %p387, %s21, 1
      %p389 = scmp.lt.s32.totalorder %s386, 15
      %s390 = scalar_select %p389, %s386, 15
      %s391 = smul.addr %s390, 2
      %s392 = smul.addr %s388, 32
      %s393 = sadd.s32 %s391, %s392
      %s394 = smul.addr %s393, 4
      %s395 = scalar_lea.vmem %s1, %s394
      %s396 = smul.u32 %s22, 8
      %s397 = ssub.s32 %s396, 1
      %p398 = scmp.gt.s32.totalorder %s397, 0
      %s399 = scalar_select %p398, %s397, 0
      %s400 = smul.u32 %s22, 8
      %s401 = sadd.s32 %s400, 8
      %p402 = scmp.lt.s32.totalorder %s401, 15
      %s403 = scalar_select %p402, %s401, 15
      %p404 = scmp.lt.s32.totalorder %s21, 1
      %s405 = scalar_select %p404, %s21, 1
      %p406 = scmp.lt.s32.totalorder %s403, 15
      %s407 = scalar_select %p406, %s403, 15
      %s408 = smul.addr %s407, 2
      %s409 = smul.addr %s405, 32
      %s410 = sadd.s32 %s408, %s409
      %s411 = smul.addr %s410, 4
      %s412 = scalar_lea.vmem %s2, %s411
      %s413 = smul.u32 %s22, 8
      %s414 = sadd.s32 %s413, 8
      %p415 = scmp.lt.s32.totalorder %s414, 15
      %s416 = scalar_select %p415, %s414, 15
      %p417 = scmp.lt.s32.totalorder %s23, 0
      %s418 = scalar_select %p417, %s23, 0
      %s419 = smul.addr %s418, 4
      %s420 = scalar_lea.vmem %s3, %s419
      %p421 = scmp.lt.s32.totalorder %s23, 0
      %s422 = scalar_select %p421, %s23, 0
      %s423 = scalar_lea.vmem %s4, %s422
      %s424 = smul.u32 16, %s22
      %p425 = scmp.lt.s32.totalorder %s21, 1
      %s426 = scalar_select %p425, %s21, 1
      %p427 = scmp.lt.s32.totalorder %s424, 31
      %s428 = scalar_select %p427, %s424, 31
      %p429 = scmp.lt.s32.totalorder %s23, 0
      %s430 = scalar_select %p429, %s23, 0
      %s431 = sadd.s32 %s430, %s428
      %s432 = smul.addr %s426, 32
      %s433 = sadd.s32 %s431, %s432
      %s434 = smul.addr %s433, 4
      %s435 = scalar_lea.vmem %s5, %s434
      %s436 = smul.u32 16, %s22
      %p438 = scmp.eq.s32.totalorder %s23, 0
      // Predicated region
      $region41: #{spectral_norm_conv_forward.3} parent=39 // pred_check
        %p439 = pneg %p438
      $region42: #{spectral_norm_conv_forward.3} parent=39 // pred_check_branch
        %441 = sbr.rel (%p439) target = $region44
      $region43: #{spectral_norm_conv_forward.3} parent=39 // pred_region
        %vm442 = vcmask 24576
        %vm443 = vsmask.f32 256
        %vm444 = vmand %vm442, %vm443
        %v445 = vld [vmem:[#allocation2] sm:$0x1]
        %v446 = vsel %vm444, 0, %v445
        %447 = vst [vmem:[#allocation2] sm:$0x1] %v446
        %v448 = vld [vmem:[#allocation2 + $0xc] sm:$0x1]
        %v449 = vsel %vm444, 0, %v448
        %450 = vst [vmem:[#allocation2 + $0xc] sm:$0x1] %v449
        %v451 = vld [vmem:[#allocation2 + $0x18] sm:$0x1]
        %v452 = vsel %vm444, 0, %v451
        %453 = vst [vmem:[#allocation2 + $0x18] sm:$0x1] %v452
        %v454 = vld [vmem:[#allocation2 + $0x24] sm:$0x1]
        %v455 = vsel %vm444, 0, %v454
        %456 = vst [vmem:[#allocation2 + $0x24] sm:$0x1] %v455
        %v457 = vld [vmem:[#allocation2 + $0x30] sm:$0x1]
        %v458 = vsel %vm444, 0, %v457
        %459 = vst [vmem:[#allocation2 + $0x30] sm:$0x1] %v458
        %v460 = vld [vmem:[#allocation2 + $0x3c] sm:$0x1]
        %v461 = vsel %vm444, 0, %v460
        %462 = vst [vmem:[#allocation2 + $0x3c] sm:$0x1] %v461
        %v463 = vld [vmem:[#allocation2 + $0x48] sm:$0x1]
        %v464 = vsel %vm444, 0, %v463
        %465 = vst [vmem:[#allocation2 + $0x48] sm:$0x1] %v464
        %v466 = vld [vmem:[#allocation2 + $0x54] sm:$0x1]
        %v467 = vsel %vm444, 0, %v466
        %468 = vst [vmem:[#allocation2 + $0x54] sm:$0x1] %v467
        %v469 = vld [vmem:[#allocation2 + $0x60] sm:$0x1]
        %v470 = vsel %vm444, 0, %v469
        %471 = vst [vmem:[#allocation2 + $0x60] sm:$0x1] %v470
        %v472 = vld [vmem:[#allocation2 + $0x6c] sm:$0x1]
        %v473 = vsel %vm444, 0, %v472
        %474 = vst [vmem:[#allocation2 + $0x6c] sm:$0x1] %v473
        %vm475 = vsmask.f32 7938
        %vm476 = vmand %vm442, %vm475
        %v477 = vld [vmem:[#allocation2 + $0x8] sm:$0x1]
        %v478 = vsel %vm476, 0, %v477
        %479 = vst [vmem:[#allocation2 + $0x8] sm:$0x1] %v478
        %v480 = vld [vmem:[#allocation2 + $0x14] sm:$0x1]
        %v481 = vsel %vm476, 0, %v480
        %482 = vst [vmem:[#allocation2 + $0x14] sm:$0x1] %v481
        %v483 = vld [vmem:[#allocation2 + $0x20] sm:$0x1]
        %v484 = vsel %vm476, 0, %v483
        %485 = vst [vmem:[#allocation2 + $0x20] sm:$0x1] %v484
        %v486 = vld [vmem:[#allocation2 + $0x2c] sm:$0x1]
        %v487 = vsel %vm476, 0, %v486
        %488 = vst [vmem:[#allocation2 + $0x2c] sm:$0x1] %v487
        %v489 = vld [vmem:[#allocation2 + $0x38] sm:$0x1]
        %v490 = vsel %vm476, 0, %v489
        %491 = vst [vmem:[#allocation2 + $0x38] sm:$0x1] %v490
        %v492 = vld [vmem:[#allocation2 + $0x44] sm:$0x1]
        %v493 = vsel %vm476, 0, %v492
        %494 = vst [vmem:[#allocation2 + $0x44] sm:$0x1] %v493
        %v495 = vld [vmem:[#allocation2 + $0x50] sm:$0x1]
        %v496 = vsel %vm476, 0, %v495
        %497 = vst [vmem:[#allocation2 + $0x50] sm:$0x1] %v496
        %v498 = vld [vmem:[#allocation2 + $0x5c] sm:$0x1]
        %v499 = vsel %vm476, 0, %v498
        %500 = vst [vmem:[#allocation2 + $0x5c] sm:$0x1] %v499
        %v501 = vld [vmem:[#allocation2 + $0x68] sm:$0x1]
        %v502 = vsel %vm476, 0, %v501
        %503 = vst [vmem:[#allocation2 + $0x68] sm:$0x1] %v502
        %v504 = vld [vmem:[#allocation2 + $0x74] sm:$0x1]
        %v505 = vsel %vm476, 0, %v504
        %506 = vst [vmem:[#allocation2 + $0x74] sm:$0x1] %v505
        %v507 = vld [vmem:[%s381] sm:$0xf]
        %v508 = vld [vmem:[%s381 + $0x4] sm:$0xf]
        %v509 = vld [vmem:[%s381 + $0x8] sm:$0xf]
        %v510 = vld [vmem:[%s381 + $0xc] sm:$0xf]
        %v511 = vld [vmem:[%s381 + $0x10] sm:$0xf]
        %v512 = vld [vmem:[%s381 + $0x14] sm:$0xf]
        %v513 = vld [vmem:[%s381 + $0x18] sm:$0xf]
        %v514 = vld [vmem:[%s381 + $0x1c] sm:$0xf]
        %v515 = vld [vmem:[%s381 + $0x20] sm:$0xf]
        %v516 = vld [vmem:[%s381 + $0x24] sm:$0xf]
        %v517 = vld [vmem:[%s381 + $0x28] sm:$0xf]
        %v518 = vld [vmem:[%s381 + $0x2c] sm:$0xf]
        %v519 = vld [vmem:[%s381 + $0x30] sm:$0xf]
        %v520 = vld [vmem:[%s381 + $0x34] sm:$0xf]
        %v521 = vld [vmem:[%s381 + $0x38] sm:$0xf]
        %v522 = vld [vmem:[%s381 + $0x3c] sm:$0xf]
        %vm523 = vsmask.f32 4368
        %vm524 = vmor %vm443, %vm523
        %v526 = vshrl.u32 %v507, 16
        %v528 = vrot.slane %v526, 7
        %v529 = vshll.u32 %v507, 16
        %v531 = vor.u32 %v528, %v529
        %v532 = vrot.slane %v528, 4
        %v534 = vshrl.u32 %v508, 16
        %v536 = vrot.slane %v534, 7
        %v537 = vshll.u32 %v508, 16
        %v539 = vor.u32 %v536, %v537
        %v540 = vsel %vm524, %v532, %v539
        %v541 = vrot.slane %v536, 4
        %v543 = vshrl.u32 %v509, 16
        %v545 = vrot.slane %v543, 7
        %v546 = vshll.u32 %v509, 16
        %v548 = vor.u32 %v545, %v546
        %v549 = vrot.slane %v545, 4
        %v551 = vshrl.u32 %v510, 16
        %v553 = vrot.slane %v551, 7
        %v554 = vshll.u32 %v510, 16
        %v556 = vor.u32 %v553, %v554
        %v557 = vsel %vm524, %v549, %v556
        %v558 = vrot.slane %v553, 4
        %v560 = vshrl.u32 %v511, 16
        %v562 = vrot.slane %v560, 7
        %v563 = vshll.u32 %v511, 16
        %v565 = vor.u32 %v562, %v563
        %v566 = vrot.slane %v562, 4
        %v568 = vshrl.u32 %v512, 16
        %v570 = vrot.slane %v568, 7
        %v571 = vshll.u32 %v512, 16
        %v573 = vor.u32 %v570, %v571
        %v574 = vsel %vm524, %v566, %v573
        %v575 = vrot.slane %v570, 4
        %v577 = vshrl.u32 %v513, 16
        %v579 = vrot.slane %v577, 7
        %v580 = vshll.u32 %v513, 16
        %v582 = vor.u32 %v579, %v580
        %v583 = vrot.slane %v579, 4
        %v585 = vshrl.u32 %v514, 16
        %v587 = vrot.slane %v585, 7
        %v588 = vshll.u32 %v514, 16
        %v590 = vor.u32 %v587, %v588
        %v591 = vsel %vm524, %v583, %v590
        %v592 = vrot.slane %v587, 4
        %v594 = vshrl.u32 %v515, 16
        %v596 = vrot.slane %v594, 7
        %v597 = vshll.u32 %v515, 16
        %v599 = vor.u32 %v596, %v597
        %v600 = vrot.slane %v596, 4
        %v602 = vshrl.u32 %v516, 16
        %v604 = vrot.slane %v602, 7
        %v605 = vshll.u32 %v516, 16
        %v607 = vor.u32 %v604, %v605
        %v608 = vsel %vm524, %v600, %v607
        %v609 = vrot.slane %v604, 4
        %v611 = vshrl.u32 %v517, 16
        %v613 = vrot.slane %v611, 7
        %v614 = vshll.u32 %v517, 16
        %v616 = vor.u32 %v613, %v614
        %v617 = vrot.slane %v613, 4
        %v619 = vshrl.u32 %v518, 16
        %v621 = vrot.slane %v619, 7
        %v622 = vshll.u32 %v518, 16
        %v624 = vor.u32 %v621, %v622
        %v625 = vsel %vm524, %v617, %v624
        %v626 = vrot.slane %v621, 4
        %v628 = vshrl.u32 %v519, 16
        %v630 = vrot.slane %v628, 7
        %v631 = vshll.u32 %v519, 16
        %v633 = vor.u32 %v630, %v631
        %v634 = vrot.slane %v630, 4
        %v636 = vshrl.u32 %v520, 16
        %v638 = vrot.slane %v636, 7
        %v639 = vshll.u32 %v520, 16
        %v641 = vor.u32 %v638, %v639
        %v642 = vsel %vm524, %v634, %v641
        %v643 = vrot.slane %v638, 4
        %v645 = vshrl.u32 %v521, 16
        %v647 = vrot.slane %v645, 7
        %v648 = vshll.u32 %v521, 16
        %v650 = vor.u32 %v647, %v648
        %v651 = vrot.slane %v647, 4
        %v653 = vshrl.u32 %v522, 16
        %v655 = vrot.slane %v653, 7
        %v656 = vshll.u32 %v522, 16
        %v658 = vor.u32 %v655, %v656
        %v659 = vsel %vm524, %v651, %v658
        %v660 = vrot.slane %v655, 4
        %s685 = scalar_lea.vmem [#allocation2], 12
        %vm686 = vcmask 27648
        %vm687 = vmand %vm686, %vm475
        %v688 = vld [vmem:[%s685] sm:$0xf]
        %v689 = vsel %vm687, %v531, %v688
        %690 = vst [vmem:[%s685] sm:$0xf] %v689
        %vm691 = vcmask 27648
        %692 = vst.msk [vmem:[%s685 + $0x4] sm:$0xf] %vm691, %v540
        %v693 = vld [vmem:[%s685 + $0x8] sm:$0x1]
        %v694 = vsel %vm444, %v541, %v693
        %695 = vst [vmem:[%s685 + $0x8] sm:$0x1] %v694
        %v696 = vld [vmem:[%s685 + $0xc] sm:$0xf]
        %v697 = vsel %vm687, %v548, %v696
        %698 = vst [vmem:[%s685 + $0xc] sm:$0xf] %v697
        %699 = vst.msk [vmem:[%s685 + $0x10] sm:$0xf] %vm691, %v557
        %v700 = vld [vmem:[%s685 + $0x14] sm:$0x1]
        %v701 = vsel %vm444, %v558, %v700
        %702 = vst [vmem:[%s685 + $0x14] sm:$0x1] %v701
        %v703 = vld [vmem:[%s685 + $0x18] sm:$0xf]
        %v704 = vsel %vm687, %v565, %v703
        %705 = vst [vmem:[%s685 + $0x18] sm:$0xf] %v704
        %706 = vst.msk [vmem:[%s685 + $0x1c] sm:$0xf] %vm691, %v574
        %v707 = vld [vmem:[%s685 + $0x20] sm:$0x1]
        %v708 = vsel %vm444, %v575, %v707
        %709 = vst [vmem:[%s685 + $0x20] sm:$0x1] %v708
        %v710 = vld [vmem:[%s685 + $0x24] sm:$0xf]
        %v711 = vsel %vm687, %v582, %v710
        %712 = vst [vmem:[%s685 + $0x24] sm:$0xf] %v711
        %713 = vst.msk [vmem:[%s685 + $0x28] sm:$0xf] %vm691, %v591
        %v714 = vld [vmem:[%s685 + $0x2c] sm:$0x1]
        %v715 = vsel %vm444, %v592, %v714
        %716 = vst [vmem:[%s685 + $0x2c] sm:$0x1] %v715
        %v717 = vld [vmem:[%s685 + $0x30] sm:$0xf]
        %v718 = vsel %vm687, %v599, %v717
        %719 = vst [vmem:[%s685 + $0x30] sm:$0xf] %v718
        %720 = vst.msk [vmem:[%s685 + $0x34] sm:$0xf] %vm691, %v608
        %v721 = vld [vmem:[%s685 + $0x38] sm:$0x1]
        %v722 = vsel %vm444, %v609, %v721
        %723 = vst [vmem:[%s685 + $0x38] sm:$0x1] %v722
        %v724 = vld [vmem:[%s685 + $0x3c] sm:$0xf]
        %v725 = vsel %vm687, %v616, %v724
        %726 = vst [vmem:[%s685 + $0x3c] sm:$0xf] %v725
        %727 = vst.msk [vmem:[%s685 + $0x40] sm:$0xf] %vm691, %v625
        %v728 = vld [vmem:[%s685 + $0x44] sm:$0x1]
        %v729 = vsel %vm444, %v626, %v728
        %730 = vst [vmem:[%s685 + $0x44] sm:$0x1] %v729
        %v731 = vld [vmem:[%s685 + $0x48] sm:$0xf]
        %v732 = vsel %vm687, %v633, %v731
        %733 = vst [vmem:[%s685 + $0x48] sm:$0xf] %v732
        %734 = vst.msk [vmem:[%s685 + $0x4c] sm:$0xf] %vm691, %v642
        %v735 = vld [vmem:[%s685 + $0x50] sm:$0x1]
        %v736 = vsel %vm444, %v643, %v735
        %737 = vst [vmem:[%s685 + $0x50] sm:$0x1] %v736
        %v738 = vld [vmem:[%s685 + $0x54] sm:$0xf]
        %v739 = vsel %vm687, %v650, %v738
        %740 = vst [vmem:[%s685 + $0x54] sm:$0xf] %v739
        %741 = vst.msk [vmem:[%s685 + $0x58] sm:$0xf] %vm691, %v659
        %v742 = vld [vmem:[%s685 + $0x5c] sm:$0x1]
        %v743 = vsel %vm444, %v660, %v742
        %744 = vst [vmem:[%s685 + $0x5c] sm:$0x1] %v743
        %p745 = scmp.gt.s32.totalorder %s22, 0
        %v746 = vld [vmem:[%s395] sm:$0xf]
        %v747 = vld [vmem:[%s395 + $0x4] sm:$0xf]
        %s748 = scalar_select %p745, 1, 0
        %v749 = vstv %s748
        %vm750 = vcmp.eq.s32.totalorder %v749, 1
        %v751 = vsel %vm750, %v746, 0
        %v752 = vsel %vm750, %v747, 0
        %p753 = scmp.lt.s32.totalorder %s22, 1
        %v754 = vld [vmem:[%s412] sm:$0xf]
        %v755 = vld [vmem:[%s412 + $0x4] sm:$0xf]
        %s756 = scalar_select %p753, 1, 0
        %v757 = vstv %s756
        %vm758 = vcmp.eq.s32.totalorder %v757, 1
        %v759 = vsel %vm758, %v754, 0
        %v760 = vsel %vm758, %v755, 0
        %v762 = vshrl.u32 %v751, 16
        %v764 = vrot.slane %v762, 7
        %v765 = vshll.u32 %v751, 16
        %v767 = vor.u32 %v764, %v765
        %v768 = vrot.slane %v764, 4
        %v770 = vshrl.u32 %v752, 16
        %v772 = vrot.slane %v770, 7
        %v773 = vshll.u32 %v752, 16
        %v775 = vor.u32 %v772, %v773
        %v776 = vsel %vm524, %v768, %v775
        %v777 = vrot.slane %v772, 4
        %v781 = vld [vmem:[#allocation2] sm:$0xf]
        %v782 = vsel %vm687, %v767, %v781
        %783 = vst [vmem:[#allocation2] sm:$0xf] %v782
        %784 = vst.msk [vmem:[#allocation2 + $0x4] sm:$0xf] %vm691, %v776
        %v785 = vld [vmem:[#allocation2 + $0x8] sm:$0x1]
        %v786 = vsel %vm444, %v777, %v785
        %787 = vst [vmem:[#allocation2 + $0x8] sm:$0x1] %v786
        %v789 = vshrl.u32 %v759, 16
        %v791 = vrot.slane %v789, 7
        %v792 = vshll.u32 %v759, 16
        %v794 = vor.u32 %v791, %v792
        %v795 = vrot.slane %v791, 4
        %v797 = vshrl.u32 %v760, 16
        %v799 = vrot.slane %v797, 7
        %v800 = vshll.u32 %v760, 16
        %v802 = vor.u32 %v799, %v800
        %v803 = vsel %vm524, %v795, %v802
        %v804 = vrot.slane %v799, 4
        %s808 = scalar_lea.vmem [#allocation2], 108
        %v809 = vld [vmem:[%s808] sm:$0xf]
        %v810 = vsel %vm687, %v794, %v809
        %811 = vst [vmem:[%s808] sm:$0xf] %v810
        %812 = vst.msk [vmem:[%s808 + $0x4] sm:$0xf] %vm691, %v803
        %v813 = vld [vmem:[%s808 + $0x8] sm:$0x1]
        %v814 = vsel %vm444, %v804, %v813
        %815 = vst [vmem:[%s808 + $0x8] sm:$0x1] %v814
        %v816 = vld [vmem:[#allocation2] sm:$0xf]
        %v817 = vld [vmem:[#allocation2 + $0x4] sm:$0xf]
        %v818 = vld [vmem:[#allocation2 + $0x8] sm:$0x1]
        %v819 = vld [vmem:[#allocation2 + $0xc] sm:$0xf]
        %v820 = vld [vmem:[#allocation2 + $0x10] sm:$0xf]
        %v821 = vld [vmem:[#allocation2 + $0x14] sm:$0x1]
        %v822 = vld [vmem:[#allocation2 + $0x18] sm:$0xf]
        %v823 = vld [vmem:[#allocation2 + $0x1c] sm:$0xf]
        %v824 = vld [vmem:[#allocation2 + $0x20] sm:$0x1]
        %v825 = vld [vmem:[#allocation2 + $0x24] sm:$0xf]
        %v826 = vld [vmem:[#allocation2 + $0x28] sm:$0xf]
        %v827 = vld [vmem:[#allocation2 + $0x2c] sm:$0x1]
        %v828 = vld [vmem:[#allocation2 + $0x30] sm:$0xf]
        %v829 = vld [vmem:[#allocation2 + $0x34] sm:$0xf]
        %v830 = vld [vmem:[#allocation2 + $0x38] sm:$0x1]
        %v831 = vld [vmem:[#allocation2 + $0x3c] sm:$0xf]
        %v832 = vld [vmem:[#allocation2 + $0x40] sm:$0xf]
        %v833 = vld [vmem:[#allocation2 + $0x44] sm:$0x1]
        %v834 = vld [vmem:[#allocation2 + $0x48] sm:$0xf]
        %v835 = vld [vmem:[#allocation2 + $0x4c] sm:$0xf]
        %v836 = vld [vmem:[#allocation2 + $0x50] sm:$0x1]
        %v837 = vld [vmem:[#allocation2 + $0x54] sm:$0xf]
        %v838 = vld [vmem:[#allocation2 + $0x58] sm:$0xf]
        %v839 = vld [vmem:[#allocation2 + $0x5c] sm:$0x1]
        %v840 = vld [vmem:[#allocation2 + $0x60] sm:$0xf]
        %v841 = vld [vmem:[#allocation2 + $0x64] sm:$0xf]
        %v842 = vld [vmem:[#allocation2 + $0x68] sm:$0x1]
        %v843 = vld [vmem:[#allocation2 + $0x6c] sm:$0xf]
        %v844 = vld [vmem:[#allocation2 + $0x70] sm:$0xf]
        %v845 = vld [vmem:[#allocation2 + $0x74] sm:$0x1]
        %v862 = vunpack.c.l.b16 %v816
        %v863 = vunpack.c.l.b16 %v817
        %v864 = vunpack.c.l.b16 %v819
        %v865 = vunpack.c.l.b16 %v820
        %v866 = vunpack.c.l.b16 %v822
        %v867 = vunpack.c.l.b16 %v823
        %v868 = vunpack.c.l.b16 %v825
        %v869 = vunpack.c.l.b16 %v826
        %v870 = vunpack.c.l.b16 %v828
        %v871 = vunpack.c.l.b16 %v829
        %v872 = vunpack.c.l.b16 %v831
        %v873 = vunpack.c.l.b16 %v832
        %v874 = vunpack.c.l.b16 %v834
        %v875 = vunpack.c.l.b16 %v835
        %v876 = vunpack.c.l.b16 %v837
        %v877 = vunpack.c.l.b16 %v838
        %v878 = vpack.c.b16 %v863, %v862
        %v879 = vpack.c.b16 %v865, %v864
        %v880 = vpack.c.b16 %v867, %v866
        %v881 = vpack.c.b16 %v869, %v868
        %v882 = vpack.c.b16 %v871, %v870
        %v883 = vpack.c.b16 %v873, %v872
        %v884 = vpack.c.b16 %v875, %v874
        %v885 = vpack.c.b16 %v877, %v876
        %vm894 = vcmask 31744
        %895 = vst.msk [vmem:[#allocation3] sm:$0xff] %vm894, %v878
        %896 = vst.msk [vmem:[#allocation3 + $0x8] sm:$0xff] %vm894, %v879
        %897 = vst.msk [vmem:[#allocation3 + $0x10] sm:$0xff] %vm894, %v880
        %898 = vst.msk [vmem:[#allocation3 + $0x18] sm:$0xff] %vm894, %v881
        %899 = vst.msk [vmem:[#allocation3 + $0x20] sm:$0xff] %vm894, %v882
        %900 = vst.msk [vmem:[#allocation3 + $0x28] sm:$0xff] %vm894, %v883
        %901 = vst.msk [vmem:[#allocation3 + $0x30] sm:$0xff] %vm894, %v884
        %902 = vst.msk [vmem:[#allocation3 + $0x38] sm:$0xff] %vm894, %v885
        %vm903 = vsmask.f32 3328
        %vm904 = vsmask.f32 7440
        %vm905 = vmor %vm903, %vm904
        %v907 = vshrl.u32 %v816, 16
        %v909 = vrot.slane %v907, 4
        %v910 = vshll.u32 %v816, 16
        %v912 = vrot.slane %v910, 5
        %v913 = vor.u32 %v909, %v912
        %v914 = vrot.slane %v913, 4
        %v916 = vshll.u32 %v817, 16
        %v918 = vrot.slane %v916, 5
        %v919 = vsel %vm905, %v914, %v918
        %v920 = vshrl.u32 %v817, 16
        %v922 = vrot.slane %v920, 4
        %v923 = vor.u32 %v922, %v918
        %v924 = vrot.slane %v923, 4
        %v926 = vshll.u32 %v818, 16
        %v928 = vrot.slane %v926, 5
        %v929 = vsel %vm905, %v924, %v928
        %v931 = vshrl.u32 %v819, 16
        %v933 = vrot.slane %v931, 4
        %v934 = vshll.u32 %v819, 16
        %v936 = vrot.slane %v934, 5
        %v937 = vor.u32 %v933, %v936
        %v938 = vrot.slane %v937, 4
        %v940 = vshll.u32 %v820, 16
        %v942 = vrot.slane %v940, 5
        %v943 = vsel %vm905, %v938, %v942
        %v944 = vshrl.u32 %v820, 16
        %v946 = vrot.slane %v944, 4
        %v947 = vor.u32 %v946, %v942
        %v948 = vrot.slane %v947, 4
        %v950 = vshll.u32 %v821, 16
        %v952 = vrot.slane %v950, 5
        %v953 = vsel %vm905, %v948, %v952
        %v955 = vshrl.u32 %v822, 16
        %v957 = vrot.slane %v955, 4
        %v958 = vshll.u32 %v822, 16
        %v960 = vrot.slane %v958, 5
        %v961 = vor.u32 %v957, %v960
        %v962 = vrot.slane %v961, 4
        %v964 = vshll.u32 %v823, 16
        %v966 = vrot.slane %v964, 5
        %v967 = vsel %vm905, %v962, %v966
        %v968 = vshrl.u32 %v823, 16
        %v970 = vrot.slane %v968, 4
        %v971 = vor.u32 %v970, %v966
        %v972 = vrot.slane %v971, 4
        %v974 = vshll.u32 %v824, 16
        %v976 = vrot.slane %v974, 5
        %v977 = vsel %vm905, %v972, %v976
        %v979 = vshrl.u32 %v825, 16
        %v981 = vrot.slane %v979, 4
        %v982 = vshll.u32 %v825, 16
        %v984 = vrot.slane %v982, 5
        %v985 = vor.u32 %v981, %v984
        %v986 = vrot.slane %v985, 4
        %v988 = vshll.u32 %v826, 16
        %v990 = vrot.slane %v988, 5
        %v991 = vsel %vm905, %v986, %v990
        %v992 = vshrl.u32 %v826, 16
        %v994 = vrot.slane %v992, 4
        %v995 = vor.u32 %v994, %v990
        %v996 = vrot.slane %v995, 4
        %v998 = vshll.u32 %v827, 16
        %v1000 = vrot.slane %v998, 5
        %v1001 = vsel %vm905, %v996, %v1000
        %v1003 = vshrl.u32 %v828, 16
        %v1005 = vrot.slane %v1003, 4
        %v1006 = vshll.u32 %v828, 16
        %v1008 = vrot.slane %v1006, 5
        %v1009 = vor.u32 %v1005, %v1008
        %v1010 = vrot.slane %v1009, 4
        %v1012 = vshll.u32 %v829, 16
        %v1014 = vrot.slane %v1012, 5
        %v1015 = vsel %vm905, %v1010, %v1014
        %v1016 = vshrl.u32 %v829, 16
        %v1018 = vrot.slane %v1016, 4
        %v1019 = vor.u32 %v1018, %v1014
        %v1020 = vrot.slane %v1019, 4
        %v1022 = vshll.u32 %v830, 16
        %v1024 = vrot.slane %v1022, 5
        %v1025 = vsel %vm905, %v1020, %v1024
        %v1027 = vshrl.u32 %v831, 16
        %v1029 = vrot.slane %v1027, 4
        %v1030 = vshll.u32 %v831, 16
        %v1032 = vrot.slane %v1030, 5
        %v1033 = vor.u32 %v1029, %v1032
        %v1034 = vrot.slane %v1033, 4
        %v1036 = vshll.u32 %v832, 16
        %v1038 = vrot.slane %v1036, 5
        %v1039 = vsel %vm905, %v1034, %v1038
        %v1040 = vshrl.u32 %v832, 16
        %v1042 = vrot.slane %v1040, 4
        %v1043 = vor.u32 %v1042, %v1038
        %v1044 = vrot.slane %v1043, 4
        %v1046 = vshll.u32 %v833, 16
        %v1048 = vrot.slane %v1046, 5
        %v1049 = vsel %vm905, %v1044, %v1048
        %v1051 = vshrl.u32 %v834, 16
        %v1053 = vrot.slane %v1051, 4
        %v1054 = vshll.u32 %v834, 16
        %v1056 = vrot.slane %v1054, 5
        %v1057 = vor.u32 %v1053, %v1056
        %v1058 = vrot.slane %v1057, 4
        %v1060 = vshll.u32 %v835, 16
        %v1062 = vrot.slane %v1060, 5
        %v1063 = vsel %vm905, %v1058, %v1062
        %v1064 = vshrl.u32 %v835, 16
        %v1066 = vrot.slane %v1064, 4
        %v1067 = vor.u32 %v1066, %v1062
        %v1068 = vrot.slane %v1067, 4
        %v1070 = vshll.u32 %v836, 16
        %v1072 = vrot.slane %v1070, 5
        %v1073 = vsel %vm905, %v1068, %v1072
        %v1075 = vshrl.u32 %v837, 16
        %v1077 = vrot.slane %v1075, 4
        %v1078 = vshll.u32 %v837, 16
        %v1080 = vrot.slane %v1078, 5
        %v1081 = vor.u32 %v1077, %v1080
        %v1082 = vrot.slane %v1081, 4
        %v1084 = vshll.u32 %v838, 16
        %v1086 = vrot.slane %v1084, 5
        %v1087 = vsel %vm905, %v1082, %v1086
        %v1088 = vshrl.u32 %v838, 16
        %v1090 = vrot.slane %v1088, 4
        %v1091 = vor.u32 %v1090, %v1086
        %v1092 = vrot.slane %v1091, 4
        %v1094 = vshll.u32 %v839, 16
        %v1096 = vrot.slane %v1094, 5
        %v1097 = vsel %vm905, %v1092, %v1096
        %v1098 = vunpack.c.l.b16 %v919
        %v1099 = vunpack.c.l.b16 %v929
        %v1100 = vunpack.c.l.b16 %v943
        %v1101 = vunpack.c.l.b16 %v953
        %v1102 = vunpack.c.l.b16 %v967
        %v1103 = vunpack.c.l.b16 %v977
        %v1104 = vunpack.c.l.b16 %v991
        %v1105 = vunpack.c.l.b16 %v1001
        %v1106 = vunpack.c.l.b16 %v1015
        %v1107 = vunpack.c.l.b16 %v1025
        %v1108 = vunpack.c.l.b16 %v1039
        %v1109 = vunpack.c.l.b16 %v1049
        %v1110 = vunpack.c.l.b16 %v1063
        %v1111 = vunpack.c.l.b16 %v1073
        %v1112 = vunpack.c.l.b16 %v1087
        %v1113 = vunpack.c.l.b16 %v1097
        %v1114 = vpack.c.b16 %v1099, %v1098
        %v1115 = vpack.c.b16 %v1101, %v1100
        %v1116 = vpack.c.b16 %v1103, %v1102
        %v1117 = vpack.c.b16 %v1105, %v1104
        %v1118 = vpack.c.b16 %v1107, %v1106
        %v1119 = vpack.c.b16 %v1109, %v1108
        %v1120 = vpack.c.b16 %v1111, %v1110
        %v1121 = vpack.c.b16 %v1113, %v1112
        %1122 = vrot.lane.b32.xlu0 %v1114, 4
        %v1123 = vpop.permute.xlu0 %1122
        %1124 = vrot.lane.b32.xlu0 %v1115, 4
        %v1125 = vpop.permute.xlu0 %1124
        %1126 = vrot.lane.b32.xlu0 %v1116, 4
        %v1127 = vpop.permute.xlu0 %1126
        %1128 = vrot.lane.b32.xlu0 %v1117, 4
        %v1129 = vpop.permute.xlu0 %1128
        %1130 = vrot.lane.b32.xlu0 %v1118, 4
        %v1131 = vpop.permute.xlu0 %1130
        %1132 = vrot.lane.b32.xlu0 %v1119, 4
        %v1133 = vpop.permute.xlu0 %1132
        %1134 = vrot.lane.b32.xlu0 %v1120, 4
        %v1135 = vpop.permute.xlu0 %1134
        %1136 = vrot.lane.b32.xlu0 %v1121, 4
        %v1137 = vpop.permute.xlu0 %1136
        %vm1146 = vcmask 64544
        %1147 = vst.msk [vmem:[#allocation3] sm:$0xff] %vm1146, %v1123
        %1148 = vst.msk [vmem:[#allocation3 + $0x8] sm:$0xff] %vm1146, %v1125
        %1149 = vst.msk [vmem:[#allocation3 + $0x10] sm:$0xff] %vm1146, %v1127
        %1150 = vst.msk [vmem:[#allocation3 + $0x18] sm:$0xff] %vm1146, %v1129
        %1151 = vst.msk [vmem:[#allocation3 + $0x20] sm:$0xff] %vm1146, %v1131
        %1152 = vst.msk [vmem:[#allocation3 + $0x28] sm:$0xff] %vm1146, %v1133
        %1153 = vst.msk [vmem:[#allocation3 + $0x30] sm:$0xff] %vm1146, %v1135
        %1154 = vst.msk [vmem:[#allocation3 + $0x38] sm:$0xff] %vm1146, %v1137
        %vm1163 = vcmask 1042432
        %vm1164 = vcmask 1046532
        %vm1165 = vmor %vm1163, %vm1164
        %v1166 = vrot.slane %v816, 5
        %v1167 = vrot.slane %v1166, 4
        %v1168 = vrot.slane %v817, 5
        %v1169 = vsel %vm1165, %v1167, %v1168
        %v1170 = vrot.slane %v1168, 4
        %v1171 = vrot.slane %v818, 5
        %v1172 = vsel %vm1165, %v1170, %v1171
        %v1173 = vrot.slane %v819, 5
        %v1174 = vrot.slane %v1173, 4
        %v1175 = vrot.slane %v820, 5
        %v1176 = vsel %vm1165, %v1174, %v1175
        %v1177 = vrot.slane %v1175, 4
        %v1178 = vrot.slane %v821, 5
        %v1179 = vsel %vm1165, %v1177, %v1178
        %v1180 = vrot.slane %v822, 5
        %v1181 = vrot.slane %v1180, 4
        %v1182 = vrot.slane %v823, 5
        %v1183 = vsel %vm1165, %v1181, %v1182
        %v1184 = vrot.slane %v1182, 4
        %v1185 = vrot.slane %v824, 5
        %v1186 = vsel %vm1165, %v1184, %v1185
        %v1187 = vrot.slane %v825, 5
        %v1188 = vrot.slane %v1187, 4
        %v1189 = vrot.slane %v826, 5
        %v1190 = vsel %vm1165, %v1188, %v1189
        %v1191 = vrot.slane %v1189, 4
        %v1192 = vrot.slane %v827, 5
        %v1193 = vsel %vm1165, %v1191, %v1192
        %v1194 = vrot.slane %v828, 5
        %v1195 = vrot.slane %v1194, 4
        %v1196 = vrot.slane %v829, 5
        %v1197 = vsel %vm1165, %v1195, %v1196
        %v1198 = vrot.slane %v1196, 4
        %v1199 = vrot.slane %v830, 5
        %v1200 = vsel %vm1165, %v1198, %v1199
        %v1201 = vrot.slane %v831, 5
        %v1202 = vrot.slane %v1201, 4
        %v1203 = vrot.slane %v832, 5
        %v1204 = vsel %vm1165, %v1202, %v1203
        %v1205 = vrot.slane %v1203, 4
        %v1206 = vrot.slane %v833, 5
        %v1207 = vsel %vm1165, %v1205, %v1206
        %v1208 = vrot.slane %v834, 5
        %v1209 = vrot.slane %v1208, 4
        %v1210 = vrot.slane %v835, 5
        %v1211 = vsel %vm1165, %v1209, %v1210
        %v1212 = vrot.slane %v1210, 4
        %v1213 = vrot.slane %v836, 5
        %v1214 = vsel %vm1165, %v1212, %v1213
        %v1215 = vrot.slane %v837, 5
        %v1216 = vrot.slane %v1215, 4
        %v1217 = vrot.slane %v838, 5
        %v1218 = vsel %vm1165, %v1216, %v1217
        %v1219 = vrot.slane %v1217, 4
        %v1220 = vrot.slane %v839, 5
        %v1221 = vsel %vm1165, %v1219, %v1220
        %v1222 = vunpack.c.l.b16 %v1169
        %v1223 = vunpack.c.l.b16 %v1172
        %v1224 = vunpack.c.l.b16 %v1176
        %v1225 = vunpack.c.l.b16 %v1179
        %v1226 = vunpack.c.l.b16 %v1183
        %v1227 = vunpack.c.l.b16 %v1186
        %v1228 = vunpack.c.l.b16 %v1190
        %v1229 = vunpack.c.l.b16 %v1193
        %v1230 = vunpack.c.l.b16 %v1197
        %v1231 = vunpack.c.l.b16 %v1200
        %v1232 = vunpack.c.l.b16 %v1204
        %v1233 = vunpack.c.l.b16 %v1207
        %v1234 = vunpack.c.l.b16 %v1211
        %v1235 = vunpack.c.l.b16 %v1214
        %v1236 = vunpack.c.l.b16 %v1218
        %v1237 = vunpack.c.l.b16 %v1221
        %v1238 = vpack.c.b16 %v1223, %v1222
        %v1239 = vpack.c.b16 %v1225, %v1224
        %v1240 = vpack.c.b16 %v1227, %v1226
        %v1241 = vpack.c.b16 %v1229, %v1228
        %v1242 = vpack.c.b16 %v1231, %v1230
        %v1243 = vpack.c.b16 %v1233, %v1232
        %v1244 = vpack.c.b16 %v1235, %v1234
        %v1245 = vpack.c.b16 %v1237, %v1236
        %1246 = vrot.lane.b32.xlu0 %v1238, 8
        %v1247 = vpop.permute.xlu0 %1246
        %1248 = vrot.lane.b32.xlu0 %v1239, 8
        %v1249 = vpop.permute.xlu0 %1248
        %1250 = vrot.lane.b32.xlu0 %v1240, 8
        %v1251 = vpop.permute.xlu0 %1250
        %1252 = vrot.lane.b32.xlu0 %v1241, 8
        %v1253 = vpop.permute.xlu0 %1252
        %1254 = vrot.lane.b32.xlu0 %v1242, 8
        %v1255 = vpop.permute.xlu0 %1254
        %1256 = vrot.lane.b32.xlu0 %v1243, 8
        %v1257 = vpop.permute.xlu0 %1256
        %1258 = vrot.lane.b32.xlu0 %v1244, 8
        %v1259 = vpop.permute.xlu0 %1258
        %1260 = vrot.lane.b32.xlu0 %v1245, 8
        %v1261 = vpop.permute.xlu0 %1260
        %vm1270 = vcmask 97344
        %1271 = vst.msk [vmem:[#allocation3] sm:$0xff] %vm1270, %v1247
        %1272 = vst.msk [vmem:[#allocation3 + $0x8] sm:$0xff] %vm1270, %v1249
        %1273 = vst.msk [vmem:[#allocation3 + $0x10] sm:$0xff] %vm1270, %v1251
        %1274 = vst.msk [vmem:[#allocation3 + $0x18] sm:$0xff] %vm1270, %v1253
        %1275 = vst.msk [vmem:[#allocation3 + $0x20] sm:$0xff] %vm1270, %v1255
        %1276 = vst.msk [vmem:[#allocation3 + $0x28] sm:$0xff] %vm1270, %v1257
        %1277 = vst.msk [vmem:[#allocation3 + $0x30] sm:$0xff] %vm1270, %v1259
        %1278 = vst.msk [vmem:[#allocation3 + $0x38] sm:$0xff] %vm1270, %v1261
        %v1281 = vunpack.c.l.b16 %v840
        %v1282 = vunpack.c.l.b16 %v841
        %v1283 = vpack.c.b16 %v1282, %v1281
        %1284 = vrot.lane.b32.xlu0 %v879, 12
        %v1285 = vpop.permute.xlu0 %1284
        %1286 = vrot.lane.b32.xlu0 %v880, 12
        %v1287 = vpop.permute.xlu0 %1286
        %1288 = vrot.lane.b32.xlu0 %v881, 12
        %v1289 = vpop.permute.xlu0 %1288
        %1290 = vrot.lane.b32.xlu0 %v882, 12
        %v1291 = vpop.permute.xlu0 %1290
        %1292 = vrot.lane.b32.xlu0 %v883, 12
        %v1293 = vpop.permute.xlu0 %1292
        %1294 = vrot.lane.b32.xlu0 %v884, 12
        %v1295 = vpop.permute.xlu0 %1294
        %1296 = vrot.lane.b32.xlu0 %v885, 12
        %v1297 = vpop.permute.xlu0 %1296
        %1298 = vrot.lane.b32.xlu0 %v1283, 12
        %v1299 = vpop.permute.xlu0 %1298
        %vm1308 = vcmask 130144
        %1309 = vst.msk [vmem:[#allocation3] sm:$0xff] %vm1308, %v1285
        %1310 = vst.msk [vmem:[#allocation3 + $0x8] sm:$0xff] %vm1308, %v1287
        %1311 = vst.msk [vmem:[#allocation3 + $0x10] sm:$0xff] %vm1308, %v1289
        %1312 = vst.msk [vmem:[#allocation3 + $0x18] sm:$0xff] %vm1308, %v1291
        %1313 = vst.msk [vmem:[#allocation3 + $0x20] sm:$0xff] %vm1308, %v1293
        %1314 = vst.msk [vmem:[#allocation3 + $0x28] sm:$0xff] %vm1308, %v1295
        %1315 = vst.msk [vmem:[#allocation3 + $0x30] sm:$0xff] %vm1308, %v1297
        %1316 = vst.msk [vmem:[#allocation3 + $0x38] sm:$0xff] %vm1308, %v1299
        %v1318 = vshrl.u32 %v840, 16
        %v1320 = vrot.slane %v1318, 4
        %v1321 = vshll.u32 %v840, 16
        %v1323 = vrot.slane %v1321, 5
        %v1324 = vor.u32 %v1320, %v1323
        %v1325 = vrot.slane %v1324, 4
        %v1327 = vshll.u32 %v841, 16
        %v1329 = vrot.slane %v1327, 5
        %v1330 = vsel %vm905, %v1325, %v1329
        %v1331 = vshrl.u32 %v841, 16
        %v1333 = vrot.slane %v1331, 4
        %v1334 = vor.u32 %v1333, %v1329
        %v1335 = vrot.slane %v1334, 4
        %v1337 = vshll.u32 %v842, 16
        %v1339 = vrot.slane %v1337, 5
        %v1340 = vsel %vm905, %v1335, %v1339
        %v1341 = vunpack.c.l.b16 %v1330
        %v1342 = vunpack.c.l.b16 %v1340
        %v1343 = vpack.c.b16 %v1342, %v1341
        %1344 = vrot.lane.b32.xlu0 %v1115, 16
        %v1345 = vpop.permute.xlu0 %1344
        %1346 = vrot.lane.b32.xlu0 %v1116, 16
        %v1347 = vpop.permute.xlu0 %1346
        %1348 = vrot.lane.b32.xlu0 %v1117, 16
        %v1349 = vpop.permute.xlu0 %1348
        %1350 = vrot.lane.b32.xlu0 %v1118, 16
        %v1351 = vpop.permute.xlu0 %1350
        %1352 = vrot.lane.b32.xlu0 %v1119, 16
        %v1353 = vpop.permute.xlu0 %1352
        %1354 = vrot.lane.b32.xlu0 %v1120, 16
        %v1355 = vpop.permute.xlu0 %1354
        %1356 = vrot.lane.b32.xlu0 %v1121, 16
        %v1357 = vpop.permute.xlu0 %1356
        %1358 = vrot.lane.b32.xlu0 %v1343, 16
        %v1359 = vpop.permute.xlu0 %1358
        %vm1368 = vcmask 162944
        %1369 = vst.msk [vmem:[#allocation3] sm:$0xff] %vm1368, %v1345
        %1370 = vst.msk [vmem:[#allocation3 + $0x8] sm:$0xff] %vm1368, %v1347
        %1371 = vst.msk [vmem:[#allocation3 + $0x10] sm:$0xff] %vm1368, %v1349
        %1372 = vst.msk [vmem:[#allocation3 + $0x18] sm:$0xff] %vm1368, %v1351
        %1373 = vst.msk [vmem:[#allocation3 + $0x20] sm:$0xff] %vm1368, %v1353
        %1374 = vst.msk [vmem:[#allocation3 + $0x28] sm:$0xff] %vm1368, %v1355
        %1375 = vst.msk [vmem:[#allocation3 + $0x30] sm:$0xff] %vm1368, %v1357
        %1376 = vst.msk [vmem:[#allocation3 + $0x38] sm:$0xff] %vm1368, %v1359
        %v1378 = vrot.slane %v840, 5
        %v1379 = vrot.slane %v1378, 4
        %v1380 = vrot.slane %v841, 5
        %v1381 = vsel %vm1165, %v1379, %v1380
        %v1382 = vrot.slane %v1380, 4
        %v1383 = vrot.slane %v842, 5
        %v1384 = vsel %vm1165, %v1382, %v1383
        %v1385 = vunpack.c.l.b16 %v1381
        %v1386 = vunpack.c.l.b16 %v1384
        %v1387 = vpack.c.b16 %v1386, %v1385
        %1388 = vrot.lane.b32.xlu0 %v1239, 20
        %v1389 = vpop.permute.xlu0 %1388
        %1390 = vrot.lane.b32.xlu0 %v1240, 20
        %v1391 = vpop.permute.xlu0 %1390
        %1392 = vrot.lane.b32.xlu0 %v1241, 20
        %v1393 = vpop.permute.xlu0 %1392
        %1394 = vrot.lane.b32.xlu0 %v1242, 20
        %v1395 = vpop.permute.xlu0 %1394
        %1396 = vrot.lane.b32.xlu0 %v1243, 20
        %v1397 = vpop.permute.xlu0 %1396
        %1398 = vrot.lane.b32.xlu0 %v1244, 20
        %v1399 = vpop.permute.xlu0 %1398
        %1400 = vrot.lane.b32.xlu0 %v1245, 20
        %v1401 = vpop.permute.xlu0 %1400
        %1402 = vrot.lane.b32.xlu0 %v1387, 20
        %v1403 = vpop.permute.xlu0 %1402
        %vm1412 = vcmask 195744
        %1413 = vst.msk [vmem:[#allocation3] sm:$0xff] %vm1412, %v1389
        %1414 = vst.msk [vmem:[#allocation3 + $0x8] sm:$0xff] %vm1412, %v1391
        %1415 = vst.msk [vmem:[#allocation3 + $0x10] sm:$0xff] %vm1412, %v1393
        %1416 = vst.msk [vmem:[#allocation3 + $0x18] sm:$0xff] %vm1412, %v1395
        %1417 = vst.msk [vmem:[#allocation3 + $0x20] sm:$0xff] %vm1412, %v1397
        %1418 = vst.msk [vmem:[#allocation3 + $0x28] sm:$0xff] %vm1412, %v1399
        %1419 = vst.msk [vmem:[#allocation3 + $0x30] sm:$0xff] %vm1412, %v1401
        %1420 = vst.msk [vmem:[#allocation3 + $0x38] sm:$0xff] %vm1412, %v1403
        %v1423 = vunpack.c.l.b16 %v843
        %v1424 = vunpack.c.l.b16 %v844
        %v1425 = vpack.c.b16 %v1424, %v1423
        %1426 = vrot.lane.b32.xlu0 %v880, 24
        %v1427 = vpop.permute.xlu0 %1426
        %1428 = vrot.lane.b32.xlu0 %v881, 24
        %v1429 = vpop.permute.xlu0 %1428
        %1430 = vrot.lane.b32.xlu0 %v882, 24
        %v1431 = vpop.permute.xlu0 %1430
        %1432 = vrot.lane.b32.xlu0 %v883, 24
        %v1433 = vpop.permute.xlu0 %1432
        %1434 = vrot.lane.b32.xlu0 %v884, 24
        %v1435 = vpop.permute.xlu0 %1434
        %1436 = vrot.lane.b32.xlu0 %v885, 24
        %v1437 = vpop.permute.xlu0 %1436
        %1438 = vrot.lane.b32.xlu0 %v1283, 24
        %v1439 = vpop.permute.xlu0 %1438
        %1440 = vrot.lane.b32.xlu0 %v1425, 24
        %v1441 = vpop.permute.xlu0 %1440
        %vm1450 = vcmask 228544
        %1451 = vst.msk [vmem:[#allocation3] sm:$0xff] %vm1450, %v1427
        %1452 = vst.msk [vmem:[#allocation3 + $0x8] sm:$0xff] %vm1450, %v1429
        %1453 = vst.msk [vmem:[#allocation3 + $0x10] sm:$0xff] %vm1450, %v1431
        %1454 = vst.msk [vmem:[#allocation3 + $0x18] sm:$0xff] %vm1450, %v1433
        %1455 = vst.msk [vmem:[#allocation3 + $0x20] sm:$0xff] %vm1450, %v1435
        %1456 = vst.msk [vmem:[#allocation3 + $0x28] sm:$0xff] %vm1450, %v1437
        %1457 = vst.msk [vmem:[#allocation3 + $0x30] sm:$0xff] %vm1450, %v1439
        %1458 = vst.msk [vmem:[#allocation3 + $0x38] sm:$0xff] %vm1450, %v1441
        %v1460 = vshrl.u32 %v843, 16
        %v1462 = vrot.slane %v1460, 4
        %v1463 = vshll.u32 %v843, 16
        %v1465 = vrot.slane %v1463, 5
        %v1466 = vor.u32 %v1462, %v1465
        %v1467 = vrot.slane %v1466, 4
        %v1469 = vshll.u32 %v844, 16
        %v1471 = vrot.slane %v1469, 5
        %v1472 = vsel %vm905, %v1467, %v1471
        %v1473 = vshrl.u32 %v844, 16
        %v1475 = vrot.slane %v1473, 4
        %v1476 = vor.u32 %v1475, %v1471
        %v1477 = vrot.slane %v1476, 4
        %v1479 = vshll.u32 %v845, 16
        %v1481 = vrot.slane %v1479, 5
        %v1482 = vsel %vm905, %v1477, %v1481
        %v1483 = vunpack.c.l.b16 %v1472
        %v1484 = vunpack.c.l.b16 %v1482
        %v1485 = vpack.c.b16 %v1484, %v1483
        %1486 = vrot.lane.b32.xlu0 %v1116, 28
        %v1487 = vpop.permute.xlu0 %1486
        %1488 = vrot.lane.b32.xlu0 %v1117, 28
        %v1489 = vpop.permute.xlu0 %1488
        %1490 = vrot.lane.b32.xlu0 %v1118, 28
        %v1491 = vpop.permute.xlu0 %1490
        %1492 = vrot.lane.b32.xlu0 %v1119, 28
        %v1493 = vpop.permute.xlu0 %1492
        %1494 = vrot.lane.b32.xlu0 %v1120, 28
        %v1495 = vpop.permute.xlu0 %1494
        %1496 = vrot.lane.b32.xlu0 %v1121, 28
        %v1497 = vpop.permute.xlu0 %1496
        %1498 = vrot.lane.b32.xlu0 %v1343, 28
        %v1499 = vpop.permute.xlu0 %1498
        %1500 = vrot.lane.b32.xlu0 %v1485, 28
        %v1501 = vpop.permute.xlu0 %1500
        %vm1510 = vcmask 261344
        %1511 = vst.msk [vmem:[#allocation3] sm:$0xff] %vm1510, %v1487
        %1512 = vst.msk [vmem:[#allocation3 + $0x8] sm:$0xff] %vm1510, %v1489
        %1513 = vst.msk [vmem:[#allocation3 + $0x10] sm:$0xff] %vm1510, %v1491
        %1514 = vst.msk [vmem:[#allocation3 + $0x18] sm:$0xff] %vm1510, %v1493
        %1515 = vst.msk [vmem:[#allocation3 + $0x20] sm:$0xff] %vm1510, %v1495
        %1516 = vst.msk [vmem:[#allocation3 + $0x28] sm:$0xff] %vm1510, %v1497
        %1517 = vst.msk [vmem:[#allocation3 + $0x30] sm:$0xff] %vm1510, %v1499
        %1518 = vst.msk [vmem:[#allocation3 + $0x38] sm:$0xff] %vm1510, %v1501
        %v1520 = vrot.slane %v843, 5
        %v1521 = vrot.slane %v1520, 4
        %v1522 = vrot.slane %v844, 5
        %v1523 = vsel %vm1165, %v1521, %v1522
        %v1524 = vrot.slane %v1522, 4
        %v1525 = vrot.slane %v845, 5
        %v1526 = vsel %vm1165, %v1524, %v1525
        %v1527 = vunpack.c.l.b16 %v1523
        %v1528 = vunpack.c.l.b16 %v1526
        %v1529 = vpack.c.b16 %v1528, %v1527
        %1530 = vrot.lane.b32.xlu0 %v1240, 32
        %v1531 = vpop.permute.xlu0 %1530
        %1532 = vrot.lane.b32.xlu0 %v1241, 32
        %v1533 = vpop.permute.xlu0 %1532
        %1534 = vrot.lane.b32.xlu0 %v1242, 32
        %v1535 = vpop.permute.xlu0 %1534
        %1536 = vrot.lane.b32.xlu0 %v1243, 32
        %v1537 = vpop.permute.xlu0 %1536
        %1538 = vrot.lane.b32.xlu0 %v1244, 32
        %v1539 = vpop.permute.xlu0 %1538
        %1540 = vrot.lane.b32.xlu0 %v1245, 32
        %v1541 = vpop.permute.xlu0 %1540
        %1542 = vrot.lane.b32.xlu0 %v1387, 32
        %v1543 = vpop.permute.xlu0 %1542
        %1544 = vrot.lane.b32.xlu0 %v1529, 32
        %v1545 = vpop.permute.xlu0 %1544
        %vm1554 = vcmask 294144
        %1555 = vst.msk [vmem:[#allocation3] sm:$0xff] %vm1554, %v1531
        %1556 = vst.msk [vmem:[#allocation3 + $0x8] sm:$0xff] %vm1554, %v1533
        %1557 = vst.msk [vmem:[#allocation3 + $0x10] sm:$0xff] %vm1554, %v1535
        %1558 = vst.msk [vmem:[#allocation3 + $0x18] sm:$0xff] %vm1554, %v1537
        %1559 = vst.msk [vmem:[#allocation3 + $0x20] sm:$0xff] %vm1554, %v1539
        %1560 = vst.msk [vmem:[#allocation3 + $0x28] sm:$0xff] %vm1554, %v1541
        %1561 = vst.msk [vmem:[#allocation3 + $0x30] sm:$0xff] %vm1554, %v1543
        %1562 = vst.msk [vmem:[#allocation3 + $0x38] sm:$0xff] %vm1554, %v1545
      $region44: #{spectral_norm_conv_forward.3} parent=39 // pred_fallthru
        _
      %v1563 = vld [vmem:[#allocation3] sm:$0xff]
      %v1564 = vld [vmem:[#allocation3 + $0x8] sm:$0xff]
      %v1565 = vld [vmem:[#allocation3 + $0x10] sm:$0xff]
      %v1566 = vld [vmem:[#allocation3 + $0x18] sm:$0xff]
      %v1567 = vld [vmem:[#allocation3 + $0x20] sm:$0xff]
      %v1568 = vld [vmem:[#allocation3 + $0x28] sm:$0xff]
      %v1569 = vld [vmem:[#allocation3 + $0x30] sm:$0xff]
      %v1570 = vld [vmem:[#allocation3 + $0x38] sm:$0xff]
      %v1571 = vld [vmem:[%s420] sm:$0xf]
      %v1572 = vld [vmem:[%s420 + $0x4] sm:$0xf]
      %v1573 = vld [vmem:[%s420 + $0x8] sm:$0xf]
      %v1574 = vld [vmem:[%s420 + $0xc] sm:$0xf]
      %v1575 = vld [vmem:[%s420 + $0x10] sm:$0x3]
      %v1576 = vld [vmem:[%s423] sm:$0x1]
      %v1578 = vlaneseq
      %v1579 = vshrl.u32 %v1578, 7
      %v1580 = vsub.s32 0, %v1579
      %v1581 = vrot.slane %v1576, %v1580
      %v1588 = vunpack.c.l.b16 %v1571
      %v1589 = vunpack.c.l.b16 %v1572
      %v1590 = vunpack.c.l.b16 %v1573
      %v1591 = vunpack.c.l.b16 %v1574
      %v1592 = vunpack.c.l.b16 %v1575
      %v1593 = vpack.c.b16 %v1589, %v1588
      %v1594 = vpack.c.b16 %v1591, %v1590
      %v1595 = vpack.c.b16 %v1592, %v1592
      %vm1598 = vcmask 293888
      %v1600 = vsel %vm1598, %v1563, 0
      %v1603 = vsel %vm1598, %v1564, 0
      %v1606 = vsel %vm1598, %v1565, 0
      %v1609 = vsel %vm1598, %v1566, 0
      %v1612 = vsel %vm1598, %v1567, 0
      %v1615 = vsel %vm1598, %v1568, 0
      %v1618 = vsel %vm1598, %v1569, 0
      %v1621 = vsel %vm1598, %v1570, 0
      %vm1623 = vcmask 1041408
      %v1625 = vsel %vm1623, %v1595, 0
      %1627 = vmatprep.subr.bf16.mxu0 0
      %1628 = vmatpush1.bf16.msra.mxu0 %v1593
      %1629 = vmatprep.subr.bf16.mxu0 0
      %1630 = vmatpush1.bf16.msra.mxu0 %v1594
      %1631 = vmatprep.subr.bf16.mxu0 0
      %1632 = vmatpush1.bf16.msra.mxu0 %v1625
      %1633 = vmatprep.subr.bf16.mxu0 0
      %1634 = vmatpush1.bf16.msra.mxu0 0
      %1635 = vmatprep.subr.bf16.mxu0 0
      %1636 = vmatpush1.bf16.msra.mxu0 0
      %1637 = vmatprep.subr.bf16.mxu0 0
      %1638 = vmatpush1.bf16.msra.mxu0 0
      %1639 = vmatprep.subr.bf16.mxu0 0
      %1640 = vmatpush1.bf16.msra.mxu0 0
      %1641 = vmatprep.subr.bf16.mxu0 0
      %1642 = vmatpush1.bf16.msra.mxu0 0
      %1643 = vmatprep.subr.bf16.mxu0 0
      %1644 = vmatpush1.bf16.msra.mxu0 0
      %1645 = vmatprep.subr.bf16.mxu0 0
      %1646 = vmatpush1.bf16.msra.mxu0 0
      %1647 = vmatprep.subr.bf16.mxu0 0
      %1648 = vmatpush1.bf16.msra.mxu0 0
      %1649 = vmatprep.subr.bf16.mxu0 0
      %1650 = vmatpush1.bf16.msra.mxu0 0
      %1651 = vmatprep.subr.bf16.mxu0 0
      %1652 = vmatpush1.bf16.msra.mxu0 0
      %1653 = vmatprep.subr.bf16.mxu0 0
      %1654 = vmatpush1.bf16.msra.mxu0 0
      %1655 = vmatprep.subr.bf16.mxu0 0
      %1656 = vmatpush1.bf16.msra.mxu0 0
      %1657 = vmatprep.subr.bf16.mxu0 0
      %1658 = vmatpush1.bf16.msra.mxu0 0
      %1659 = vmatprep.mubr.bf16.mxu0 0
      %1660 = vmatmul.mubr.bf16.gmra.mrb[0].mxu0 %v1600
      %v1661 = vpop.f32.mrb[0].mxu0
      %v1662 = vadd.f32 %v1581, %v1661
      %v1663 = vpop.f32.mrb[0].mxu0
      %v1664 = vpop.f32.mrb[0].mxu0
      %v1665 = vadd.f32 %v1581, %v1664
      %v1666 = vpop.f32.mrb[0].mxu0
      %1667 = vmatprep.mubr.bf16.mxu0 0
      %1668 = vmatmul.mubr.bf16.gmra.mrb[0].mxu0 %v1603
      %v1669 = vpop.f32.mrb[0].mxu0
      %v1670 = vadd.f32 %v1581, %v1669
      %v1671 = vpop.f32.mrb[0].mxu0
      %v1672 = vpop.f32.mrb[0].mxu0
      %v1673 = vadd.f32 %v1581, %v1672
      %v1674 = vpop.f32.mrb[0].mxu0
      %1675 = vmatprep.mubr.bf16.mxu0 0
      %1676 = vmatmul.mubr.bf16.gmra.mrb[0].mxu0 %v1606
      %v1677 = vpop.f32.mrb[0].mxu0
      %v1678 = vadd.f32 %v1581, %v1677
      %v1679 = vpop.f32.mrb[0].mxu0
      %v1680 = vpop.f32.mrb[0].mxu0
      %v1681 = vadd.f32 %v1581, %v1680
      %v1682 = vpop.f32.mrb[0].mxu0
      %1683 = vmatprep.mubr.bf16.mxu0 0
      %1684 = vmatmul.mubr.bf16.gmra.mrb[0].mxu0 %v1609
      %v1685 = vpop.f32.mrb[0].mxu0
      %v1686 = vadd.f32 %v1581, %v1685
      %v1687 = vpop.f32.mrb[0].mxu0
      %v1688 = vpop.f32.mrb[0].mxu0
      %v1689 = vadd.f32 %v1581, %v1688
      %v1690 = vpop.f32.mrb[0].mxu0
      %1691 = vmatprep.mubr.bf16.mxu0 0
      %1692 = vmatmul.mubr.bf16.gmra.mrb[0].mxu0 %v1612
      %v1693 = vpop.f32.mrb[0].mxu0
      %v1694 = vadd.f32 %v1581, %v1693
      %v1695 = vpop.f32.mrb[0].mxu0
      %v1696 = vpop.f32.mrb[0].mxu0
      %v1697 = vadd.f32 %v1581, %v1696
      %v1698 = vpop.f32.mrb[0].mxu0
      %1699 = vmatprep.mubr.bf16.mxu0 0
      %1700 = vmatmul.mubr.bf16.gmra.mrb[0].mxu0 %v1615
      %v1701 = vpop.f32.mrb[0].mxu0
      %v1702 = vadd.f32 %v1581, %v1701
      %v1703 = vpop.f32.mrb[0].mxu0
      %v1704 = vpop.f32.mrb[0].mxu0
      %v1705 = vadd.f32 %v1581, %v1704
      %v1706 = vpop.f32.mrb[0].mxu0
      %1707 = vmatprep.mubr.bf16.mxu0 0
      %1708 = vmatmul.mubr.bf16.gmra.mrb[0].mxu0 %v1618
      %v1709 = vpop.f32.mrb[0].mxu0
      %v1710 = vadd.f32 %v1581, %v1709
      %v1711 = vpop.f32.mrb[0].mxu0
      %v1712 = vpop.f32.mrb[0].mxu0
      %v1713 = vadd.f32 %v1581, %v1712
      %v1714 = vpop.f32.mrb[0].mxu0
      %1715 = vmatprep.mubr.bf16.mxu0 0
      %1716 = vmatmul.mubr.bf16.gmra.mrb[0].mxu0 %v1621
      %v1717 = vpop.f32.mrb[0].mxu0
      %v1718 = vadd.f32 %v1581, %v1717
      %v1719 = vpop.f32.mrb[0].mxu0
      %v1720 = vpop.f32.mrb[0].mxu0
      %v1721 = vadd.f32 %v1581, %v1720
      %v1722 = vpop.f32.mrb[0].mxu0
      %1723 = vdwg.mxu0
      %v1724 = vpack.c.bf16 %v1665, %v1662
      %v1725 = vpack.c.bf16 %v1673, %v1670
      %v1726 = vpack.c.bf16 %v1681, %v1678
      %v1727 = vpack.c.bf16 %v1689, %v1686
      %v1728 = vpack.c.bf16 %v1697, %v1694
      %v1729 = vpack.c.bf16 %v1705, %v1702
      %v1730 = vpack.c.bf16 %v1713, %v1710
      %v1731 = vpack.c.bf16 %v1721, %v1718
      %v1740 = vunpack.c.l.b16 %v1724
      %v1741 = vunpack.c.h.b16 %v1724
      %v1742 = vunpack.c.l.b16 %v1725
      %v1743 = vunpack.c.h.b16 %v1725
      %v1744 = vunpack.c.l.b16 %v1726
      %v1745 = vunpack.c.h.b16 %v1726
      %v1746 = vunpack.c.l.b16 %v1727
      %v1747 = vunpack.c.h.b16 %v1727
      %v1748 = vunpack.c.l.b16 %v1728
      %v1749 = vunpack.c.h.b16 %v1728
      %v1750 = vunpack.c.l.b16 %v1729
      %v1751 = vunpack.c.h.b16 %v1729
      %v1752 = vunpack.c.l.b16 %v1730
      %v1753 = vunpack.c.h.b16 %v1730
      %v1754 = vunpack.c.l.b16 %v1731
      %v1755 = vunpack.c.h.b16 %v1731
      %v1756 = vpack.c.b16 %v1740, %v1740
      %v1757 = vpack.c.b16 %v1741, %v1741
      %v1758 = vpack.c.b16 %v1742, %v1742
      %v1759 = vpack.c.b16 %v1743, %v1743
      %v1760 = vpack.c.b16 %v1744, %v1744
      %v1761 = vpack.c.b16 %v1745, %v1745
      %v1762 = vpack.c.b16 %v1746, %v1746
      %v1763 = vpack.c.b16 %v1747, %v1747
      %v1764 = vpack.c.b16 %v1748, %v1748
      %v1765 = vpack.c.b16 %v1749, %v1749
      %v1766 = vpack.c.b16 %v1750, %v1750
      %v1767 = vpack.c.b16 %v1751, %v1751
      %v1768 = vpack.c.b16 %v1752, %v1752
      %v1769 = vpack.c.b16 %v1753, %v1753
      %v1770 = vpack.c.b16 %v1754, %v1754
      %v1771 = vpack.c.b16 %v1755, %v1755
      %1788 = vst [vmem:[%s435] sm:$0xf] %v1756
      %1789 = vst [vmem:[%s435 + $0x4] sm:$0xf] %v1757
      %1790 = vst [vmem:[%s435 + $0x8] sm:$0xf] %v1758
      %1791 = vst [vmem:[%s435 + $0xc] sm:$0xf] %v1759
      %1792 = vst [vmem:[%s435 + $0x10] sm:$0xf] %v1760
      %1793 = vst [vmem:[%s435 + $0x14] sm:$0xf] %v1761
      %1794 = vst [vmem:[%s435 + $0x18] sm:$0xf] %v1762
      %1795 = vst [vmem:[%s435 + $0x1c] sm:$0xf] %v1763
      %1796 = vst [vmem:[%s435 + $0x20] sm:$0xf] %v1764
      %1797 = vst [vmem:[%s435 + $0x24] sm:$0xf] %v1765
      %1798 = vst [vmem:[%s435 + $0x28] sm:$0xf] %v1766
      %1799 = vst [vmem:[%s435 + $0x2c] sm:$0xf] %v1767
      %1800 = vst [vmem:[%s435 + $0x30] sm:$0xf] %v1768
      %1801 = vst [vmem:[%s435 + $0x34] sm:$0xf] %v1769
      %1802 = vst [vmem:[%s435 + $0x38] sm:$0xf] %v1770
      %1803 = vst [vmem:[%s435 + $0x3c] sm:$0xf] %v1771
      %s1804 = smul.u32 16, %s22
      %p1805 = scmp.lt.s32.totalorder %s21, 1
      %s1806 = scalar_select %p1805, %s21, 1
      %p1807 = scmp.lt.s32.totalorder %s1804, 31
      %s1808 = scalar_select %p1807, %s1804, 31
      %p1809 = scmp.lt.s32.totalorder %s23, 0
      %s1810 = scalar_select %p1809, %s23, 0
      %s1811 = sadd.s32 %s1810, %s1808
      %s1812 = smul.addr %s1806, 32
      %s1813 = sadd.s32 %s1811, %s1812
      %s1814 = smul.addr %s1813, 4
      %s1815 = scalar_lea.vmem %s5, %s1814
      // Predicated region
      $region45: #{spectral_norm_conv_forward.3} parent=39 // pred_check
        %p1816 = pneg %p209
      $region46: #{spectral_norm_conv_forward.3} parent=39 // pred_check_branch
        %1818 = sbr.rel (%p1816) target = $region48
      $region47: #{spectral_norm_conv_forward.3} parent=39 // pred_region
        %s1819 = smul.u32 16, %s22
      $region48: #{spectral_norm_conv_forward.3} parent=39 // pred_fallthru
        _
    $region40: #{spectral_norm_conv_forward.3} parent=5 // pred_fallthru
      _
    %p1820 = scmp.le.s32.totalorder 2, %s11
    // Predicated region
    $region49: #{spectral_norm_conv_forward.3} parent=5 // pred_check
      %p1821 = pneg %p1820
    $region50: #{spectral_norm_conv_forward.3} parent=5 // pred_check_branch
      %1823 = sbr.rel (%p1821) target = $region52
    $region51: #{spectral_norm_conv_forward.3} parent=5 // pred_region
      %s1824 = ssub.s32 %s11, 2
      // Predicated region
      $region53: #{spectral_norm_conv_forward.3} parent=51 // pred_check
        %p1825 = pneg %p215
      $region54: #{spectral_norm_conv_forward.3} parent=51 // pred_check_branch
        %1827 = sbr.rel (%p1825) target = $region56
      $region55: #{spectral_norm_conv_forward.3} parent=51 // pred_region
        %s1828 = smul.u32 16, %s25
        %p1829 = scmp.lt.s32.totalorder %s24, 1
        %s1830 = scalar_select %p1829, %s24, 1
        %p1831 = scmp.lt.s32.totalorder %s1828, 31
        %s1832 = scalar_select %p1831, %s1828, 31
        %p1833 = scmp.lt.s32.totalorder %s26, 0
        %s1834 = scalar_select %p1833, %s26, 0
        %s1835 = sadd.s32 %s1834, %s1832
        %s1836 = smul.addr %s1830, 32
        %s1837 = sadd.s32 %s1835, %s1836
        %s1838 = smul.addr %s1837, 4
        %s1839 = scalar_lea.vmem %s5, %s1838
      $region56: #{spectral_norm_conv_forward.3} parent=51 // pred_fallthru
        _
    $region52: #{spectral_norm_conv_forward.3} parent=5 // pred_fallthru
      _
  $region6: #{spectral_norm_conv_forward.3} parent=0 // loop_footer
    %s15 = sadd.s32 1, %s11
  $region7: #{spectral_norm_conv_forward.3} parent=0 // loop_footer_branch
    %10 = sbr.rel target = $region3
  $region8: #{spectral_norm_conv_forward.3} parent=0 // loop_exit
    _

</llo_original>
